<compile_context>
chip_gen: v5e
topology: v5e:2x2
jax: 0.10.0
libtpu: 0.0.40
codegen_flags: <defaults>
</compile_context>

<pallas_src>
import math
from functools import partial

import jax
import jax.numpy as jnp
from jax.experimental import pallas as pl
from jax.experimental.pallas import tpu as pltpu

EPS = 1e-5
LEVELS = 3
REDUCTION = 16

PARAM_ORDER = ("wy", "by", "wxh", "bxh", "wxw", "bxw",
               "wfac", "w1", "b1", "w2", "b2")


def _regroup(pieces, axis):
    """Concatenate small static slices (identity when there is a single piece)."""
    if len(pieces) == 1:
        return pieces[0]
    return jnp.concatenate(pieces, axis=axis)


# ----------------------------------------------------------------------------
# Pallas kernel: NB batch elements per grid step, lane-dense (NB, C, H*W) blocks.
# ----------------------------------------------------------------------------
def attention_kernel(x_ref, wy_ref, by_ref, wxh_ref, bxh_ref, wxw_ref, bxw_ref,
                     wfac_ref, w1_ref, b1_ref, w2_ref, b2_ref,
                     ph_ref, pw_ref, eh_ref, ew_ref, sh_ref, sw_ref,
                     o_ref, *, nb, c, h, w):
    hw = h * w
    # (NB, C, HW) -> (NB*C, HW): lane-dense rows, leading-dim collapse only.
    xf = x_ref[...].reshape(nb * c, hw)

    # ---- CoordPooling on the MXU (no reshape/relayout of the big slab):
    #      xh_bc[b*C+c, h] = mean_w x[b,c,h,w] ; xw_bc[b*C+c, w] = mean_h x[b,c,h,w]
    xh_bc = jnp.dot(xf, ph_ref[...], preferred_element_type=jnp.float32)   # (NB*C, H)
    xw_bc = jnp.dot(xf, pw_ref[...], preferred_element_type=jnp.float32)   # (NB*C, W)

    # ---- regroup (b,c)-major rows into channel-major matrices with the batch
    #      folded into the matmul free dim: (C, NB*H) / (C, NB*W).
    xh_cb = _regroup([xh_bc[b * c:(b + 1) * c, :] for b in range(nb)], axis=1)
    xw_cb = _regroup([xw_bc[b * c:(b + 1) * c, :] for b in range(nb)], axis=1)

    # ---- conv_y (1x1 conv == channel matmul, BN folded, ReLU). The torch
    #      cat/chunk factorizes exactly across the two pooled halves.
    y_h = jnp.maximum(
        jnp.dot(wy_ref[...], xh_cb, preferred_element_type=jnp.float32) + by_ref[...],
        0.0)                                                               # (C, NB*H)
    y_w = jnp.maximum(
        jnp.dot(wy_ref[...], xw_cb, preferred_element_type=jnp.float32) + by_ref[...],
        0.0)                                                               # (C, NB*W)

    # ---- conv_x_h / conv_x_w (BN folded, ReLU)
    xh3 = jnp.maximum(
        jnp.dot(wxh_ref[...], y_h, preferred_element_type=jnp.float32) + bxh_ref[...],
        0.0)                                                               # (C, NB*H)
    xw3 = jnp.maximum(
        jnp.dot(wxw_ref[...], y_w, preferred_element_type=jnp.float32) + bxw_ref[...],
        0.0)                                                               # (C, NB*W)

    # ---- SFP gate: mean of the level-i Haar approximation over the pooled axis
    #      == (channel mean of y) * sqrt(2)**i  (exact when (H+W) % 2**levels == 0).
    #      Per-image channel sums via tiny MXU dots (no lane-group reshapes).
    wsum = (jnp.dot(y_h, sh_ref[...], preferred_element_type=jnp.float32)
            + jnp.dot(y_w, sw_ref[...], preferred_element_type=jnp.float32))   # (C, NB)
    wmean = wsum * (1.0 / (h + w)) * wfac_ref[...]                              # (C, NB)
    hid = jnp.maximum(
        jnp.dot(w1_ref[...], wmean, preferred_element_type=jnp.float32) + b1_ref[...],
        0.0)                                                                    # (hid, NB)
    z = jnp.dot(w2_ref[...], hid, preferred_element_type=jnp.float32) + b2_ref[...]  # (C, NB)

    # ---- back to (b,c)-major rows; lane-dense broadcast expansion on the MXU.
    xh3_bc = _regroup([xh3[:, b * h:(b + 1) * h] for b in range(nb)], axis=0)   # (NB*C, H)
    xw3_bc = _regroup([xw3[:, b * w:(b + 1) * w] for b in range(nb)], axis=0)   # (NB*C, W)
    z_bc = _regroup([z[:, b:b + 1] for b in range(nb)], axis=0)                 # (NB*C, 1)

    att_h = jnp.dot(xh3_bc, eh_ref[...], preferred_element_type=jnp.float32)    # (NB*C, HW)
    att_w = jnp.dot(xw3_bc, ew_ref[...], preferred_element_type=jnp.float32)    # (NB*C, HW)
    gate = jax.nn.sigmoid(att_h * att_w)

    # ---- factored fuse: x * (sigmoid(x_h (x) x_w) + z)
    o_ref[...] = (xf * (gate + z_bc)).reshape(nb, c, hw)


# ----------------------------------------------------------------------------
# Wrapper: tile selection, layout constants, pallas_call.
# ----------------------------------------------------------------------------
def _pick_nb(n, c, hw, h, w):
    # Fill the MXU free dim (NB*max(H,W) ~ 128) while keeping >=2 grid steps
    # (v7x has 2 TensorCores) and staying inside a conservative VMEM budget
    # (v7x only has 64 MiB; in+out double-buffered blocks ~ 4 * NB*C*HW*4 bytes).
    target_mxu = max(1, -(-128 // max(h, w)))
    vmem_budget = 8 * 1024 * 1024
    target_vmem = max(1, vmem_budget // (4 * c * hw * 4))
    target = max(1, min(target_mxu, target_vmem))
    divisors = [d for d in range(1, n + 1) if n % d == 0]
    good = [d for d in divisors if d <= target and n // d >= 2]
    if good:
        return max(good)
    ok = [d for d in divisors if d <= target]
    return max(ok) if ok else 1


def attention_forward(x, folded):
    n, c, h, w = x.shape
    hw = h * w
    # Haar-approx == mean*sqrt(2)**level identity needs divisible pooled length.
    assert (h + w) % (2 ** LEVELS) == 0, "(H + W) must be divisible by 2**levels"

    nb = _pick_nb(n, c, hw, h, w)

    # Constant layout matrices (consumed by the MXU inside the kernel).
    eye_h = jnp.eye(h, dtype=jnp.float32)
    eye_w = jnp.eye(w, dtype=jnp.float32)
    e_h = jnp.kron(eye_h, jnp.ones((1, w), jnp.float32))        # (H, HW): E_h[h, h*W+w] = 1
    e_w = jnp.kron(jnp.ones((1, h), jnp.float32), eye_w)        # (W, HW): E_w[w, h*W+w] = 1
    p_h = e_h.T / float(w)                                      # (HW, H): pool over w
    p_w = e_w.T / float(h)                                      # (HW, W): pool over h
    s_h = jnp.kron(jnp.eye(nb, dtype=jnp.float32),
                   jnp.ones((h, 1), jnp.float32))               # (NB*H, NB): per-image sum
    s_w = jnp.kron(jnp.eye(nb, dtype=jnp.float32),
                   jnp.ones((w, 1), jnp.float32))               # (NB*W, NB)

    params = [folded[k] for k in PARAM_ORDER] + [p_h, p_w, e_h, e_w, s_h, s_w]

    x3 = x.reshape(n, c, hw)                                    # lane-dense view (free)

    in_specs = [pl.BlockSpec((nb, c, hw), lambda i: (i, 0, 0))]
    # Weight/constant blocks have a constant block index -> fetched once across the
    # grid. (pl.Buffered(1) would additionally trim their double buffers.)
    in_specs += [pl.BlockSpec(p.shape, lambda i: (0, 0)) for p in params]

    block_bytes = nb * c * hw * 4
    vmem_limit = int(min(64 * 1024 * 1024,
                         max(16 * 1024 * 1024, 6 * block_bytes)))

    out = pl.pallas_call(
        partial(attention_kernel, nb=nb, c=c, h=h, w=w),
        out_shape=jax.ShapeDtypeStruct((n, c, hw), jnp.float32),
        grid_spec=pltpu.PrefetchScalarGridSpec(
            num_scalar_prefetch=0,
            grid=(n // nb,),
            in_specs=in_specs,
            out_specs=pl.BlockSpec((nb, c, hw), lambda i: (i, 0, 0)),
        ),
        compiler_params=pltpu.CompilerParams(
            dimension_semantics=("parallel",),
            vmem_limit_bytes=vmem_limit,
        ),
    )(x3, *params)
    return out.reshape(n, c, h, w)


# ----------------------------------------------------------------------------
# Deterministic parameter init (raw torch-like params) + BN folding.
# ----------------------------------------------------------------------------
def init_params(key, C):
    hid = C // REDUCTION
    assert hid >= 1 and C % LEVELS == 0
    ks = list(jax.random.split(key, 32))
    nxt = iter(ks).__next__

    def conv_bn_raw():
        w = jax.random.normal(nxt(), (C, C), jnp.float32) * 0.1          # Conv2d 1x1, no bias
        g = jax.random.uniform(nxt(), (C,), jnp.float32, 0.5, 1.5)        # BN gamma
        b = jax.random.normal(nxt(), (C,), jnp.float32) * 0.1             # BN beta
        m = jax.random.normal(nxt(), (C,), jnp.float32) * 0.1             # running mean
        v = jax.random.uniform(nxt(), (C,), jnp.float32, 0.5, 1.5)        # running var
        return (w, g, b, m, v)

    raw = {"conv_y": conv_bn_raw(),
           "conv_x_h": conv_bn_raw(),
           "conv_x_w": conv_bn_raw()}

    w1 = jax.random.normal(nxt(), (hid, C), jnp.float32) * 0.1
    b1 = jax.random.normal(nxt(), (hid,), jnp.float32) * 0.1
    g1 = jax.random.uniform(nxt(), (hid,), jnp.float32, 0.5, 1.5)
    be1 = jax.random.normal(nxt(), (hid,), jnp.float32) * 0.1
    m1 = jax.random.normal(nxt(), (hid,), jnp.float32) * 0.1
    v1 = jax.random.uniform(nxt(), (hid,), jnp.float32, 0.5, 1.5)
    w2 = jax.random.normal(nxt(), (C, hid), jnp.float32) * 0.1
    b2 = jax.random.normal(nxt(), (C,), jnp.float32) * 0.1
    raw["gate"] = (w1, b1, g1, be1, m1, v1, w2, b2)

    # ---- fold BN (eval mode) into the affine ops
    def fold_conv(p):
        w, g, b, m, v = p
        s = g / jnp.sqrt(v + EPS)
        return s[:, None] * w, (b - s * m)[:, None]

    folded = {}
    folded["wy"], folded["by"] = fold_conv(raw["conv_y"])
    folded["wxh"], folded["bxh"] = fold_conv(raw["conv_x_h"])
    folded["wxw"], folded["bxw"] = fold_conv(raw["conv_x_w"])

    s1 = g1 / jnp.sqrt(v1 + EPS)
    folded["w1"] = s1[:, None] * w1
    folded["b1"] = (s1 * (b1 - m1) + be1)[:, None]
    folded["w2"] = w2
    folded["b2"] = b2[:, None]

    # per-channel wavelet scale: chunk i (1-indexed) -> sqrt(2)**i
    per = C // LEVELS
    folded["wfac"] = jnp.concatenate(
        [jnp.full((per,), math.sqrt(2.0) ** i, jnp.float32)
         for i in range(1, LEVELS + 1)])[:, None]
    return raw, folded


# ----------------------------------------------------------------------------
# Pure-JAX reference (mirrors the PyTorch forward with raw params).
# ----------------------------------------------------------------------------
def ref_forward(x, raw):
    N, C, H, W = x.shape
    xh = jnp.mean(x, axis=3)                    # AvgPool2d (1, h): (N, C, H)
    xw = jnp.mean(x, axis=2)                    # AvgPool2d (w, 1) + permute: (N, C, W)
    y = jnp.concatenate([xh, xw], axis=2)       # (N, C, H+W)

    def conv_bn_relu(t, p):
        w, g, b, m, v = p
        o = jnp.einsum("oc,ncl->nol", w, t)
        o = g[None, :, None] * (o - m[None, :, None]) / jnp.sqrt(v[None, :, None] + EPS) \
            + b[None, :, None]
        return jnp.maximum(o, 0.0)

    y = conv_bn_relu(y, raw["conv_y"])
    xh3 = conv_bn_relu(y[:, :, :H], raw["conv_x_h"])     # (N, C, H)
    xw3 = conv_bn_relu(y[:, :, H:], raw["conv_x_w"])     # (N, C, W)

    # SFP: Haar wavedec approx (symmetric mode, even lengths) per channel chunk
    chunks = jnp.split(y, LEVELS, axis=1)
    zs = []
    for i, k in enumerate(chunks, start=1):
        a = k
        for _ in range(i):
            a = (a[..., 0::2] + a[..., 1::2]) / jnp.sqrt(2.0)
        zs.append(jnp.mean(a, axis=2))
    zc = jnp.concatenate(zs, axis=1)                     # (N, C)

    w1, b1, g1, be1, m1, v1, w2, b2 = raw["gate"]
    h = zc @ w1.T + b1
    h = g1 * (h - m1) / jnp.sqrt(v1 + EPS) + be1
    h = jnp.maximum(h, 0.0)
    z = h @ w2.T + b2                                    # (N, C)

    return (x * jax.nn.sigmoid(xh3[:, :, :, None] * xw3[:, :, None, :])
            + x * z[:, :, None, None])


if __name__ == "__main__":
    N, C, S = 8, 48, 8          # H = W = S; (H+W)=16 divisible by 2**LEVELS
    key = jax.random.PRNGKey(0)
    kx, kp = jax.random.split(key)
    x = jax.random.normal(kx, (N, C, S, S), jnp.float32)

    raw, folded = init_params(kp, C)

    out = attention_forward(x, folded)
    out = jax.block_until_ready(out)

    ref = jax.block_until_ready(ref_forward(x, raw))
    assert out.shape == (N, C, S, S)
    assert jnp.allclose(out, ref, atol=5e-4, rtol=5e-4), \
        float(jnp.max(jnp.abs(out - ref)))

    print("KERNEL_OK")
</pallas_src>

<mosaic_0001>
module attributes {stable_mosaic.version = 11 : i64} {
  func.func @attention_kernel(%arg0: i32, %arg1: memref<4x48x64xf32, #tpu.memory_space<vmem>>, %arg2: memref<48x48xf32, #tpu.memory_space<vmem>>, %arg3: memref<48x1xf32, #tpu.memory_space<vmem>>, %arg4: memref<48x48xf32, #tpu.memory_space<vmem>>, %arg5: memref<48x1xf32, #tpu.memory_space<vmem>>, %arg6: memref<48x48xf32, #tpu.memory_space<vmem>>, %arg7: memref<48x1xf32, #tpu.memory_space<vmem>>, %arg8: memref<48x1xf32, #tpu.memory_space<vmem>>, %arg9: memref<3x48xf32, #tpu.memory_space<vmem>>, %arg10: memref<3x1xf32, #tpu.memory_space<vmem>>, %arg11: memref<48x3xf32, #tpu.memory_space<vmem>>, %arg12: memref<48x1xf32, #tpu.memory_space<vmem>>, %arg13: memref<64x8xf32, #tpu.memory_space<vmem>>, %arg14: memref<64x8xf32, #tpu.memory_space<vmem>>, %arg15: memref<8x64xf32, #tpu.memory_space<vmem>>, %arg16: memref<8x64xf32, #tpu.memory_space<vmem>>, %arg17: memref<32x4xf32, #tpu.memory_space<vmem>>, %arg18: memref<32x4xf32, #tpu.memory_space<vmem>>, %arg19: memref<4x48x64xf32, #tpu.memory_space<vmem>>) attributes {dimension_semantics = [#tpu.dimension_semantics<parallel>], iteration_bounds = array<i64: 2>, scalar_prefetch = 0 : i64, scratch_operands = 0 : i64, tpu.core_type = #tpu.core_type<tc>, window_params = [{transform_indices = @transform_0, window_bounds = array<i64: 4, 48, 64>}, {pipeline_mode = #tpu.pipeline_mode<synchronous>, transform_indices = @transform_1, window_bounds = array<i64: 48, 48>}, {pipeline_mode = #tpu.pipeline_mode<synchronous>, transform_indices = @transform_2, window_bounds = array<i64: 48, 1>}, {pipeline_mode = #tpu.pipeline_mode<synchronous>, transform_indices = @transform_3, window_bounds = array<i64: 48, 48>}, {pipeline_mode = #tpu.pipeline_mode<synchronous>, transform_indices = @transform_4, window_bounds = array<i64: 48, 1>}, {pipeline_mode = #tpu.pipeline_mode<synchronous>, transform_indices = @transform_5, window_bounds = array<i64: 48, 48>}, {pipeline_mode = #tpu.pipeline_mode<synchronous>, transform_indices = @transform_6, window_bounds = array<i64: 48, 1>}, {pipeline_mode = #tpu.pipeline_mode<synchronous>, transform_indices = @transform_7, window_bounds = array<i64: 48, 1>}, {pipeline_mode = #tpu.pipeline_mode<synchronous>, transform_indices = @transform_8, window_bounds = array<i64: 3, 48>}, {pipeline_mode = #tpu.pipeline_mode<synchronous>, transform_indices = @transform_9, window_bounds = array<i64: 3, 1>}, {pipeline_mode = #tpu.pipeline_mode<synchronous>, transform_indices = @transform_10, window_bounds = array<i64: 48, 3>}, {pipeline_mode = #tpu.pipeline_mode<synchronous>, transform_indices = @transform_11, window_bounds = array<i64: 48, 1>}, {pipeline_mode = #tpu.pipeline_mode<synchronous>, transform_indices = @transform_12, window_bounds = array<i64: 64, 8>}, {pipeline_mode = #tpu.pipeline_mode<synchronous>, transform_indices = @transform_13, window_bounds = array<i64: 64, 8>}, {pipeline_mode = #tpu.pipeline_mode<synchronous>, transform_indices = @transform_14, window_bounds = array<i64: 8, 64>}, {pipeline_mode = #tpu.pipeline_mode<synchronous>, transform_indices = @transform_15, window_bounds = array<i64: 8, 64>}, {pipeline_mode = #tpu.pipeline_mode<synchronous>, transform_indices = @transform_16, window_bounds = array<i64: 32, 4>}, {pipeline_mode = #tpu.pipeline_mode<synchronous>, transform_indices = @transform_17, window_bounds = array<i64: 32, 4>}, {transform_indices = @transform_18, window_bounds = array<i64: 4, 48, 64>}]} {
    %c0 = arith.constant 0 : index
    %c0_0 = arith.constant 0 : index
    %c0_1 = arith.constant 0 : index
    %0 = vector.load %arg1[%c0, %c0_0, %c0_1] : memref<4x48x64xf32, #tpu.memory_space<vmem>>, vector<4x48x64xf32>
    %1 = vector.shape_cast %0 : vector<4x48x64xf32> to vector<192x64xf32>
    %c0_2 = arith.constant 0 : index
    %c0_3 = arith.constant 0 : index
    %2 = vector.load %arg13[%c0_2, %c0_3] : memref<64x8xf32, #tpu.memory_space<vmem>>, vector<64x8xf32>
    %cst = arith.constant dense<0.000000e+00> : vector<192x8xf32>
    %3 = tpu.matmul %1, %2, %cst {dimension_numbers = #tpu.dot_dimension_numbers<[1], [0], [0], [1], [0, 0, 1, 1], [], []>} : vector<192x64xf32>, vector<64x8xf32>, vector<192x8xf32> -> vector<192x8xf32>
    %c0_4 = arith.constant 0 : index
    %c0_5 = arith.constant 0 : index
    %4 = vector.load %arg14[%c0_4, %c0_5] : memref<64x8xf32, #tpu.memory_space<vmem>>, vector<64x8xf32>
    %cst_6 = arith.constant dense<0.000000e+00> : vector<192x8xf32>
    %5 = tpu.matmul %1, %4, %cst_6 {dimension_numbers = #tpu.dot_dimension_numbers<[1], [0], [0], [1], [0, 0, 1, 1], [], []>} : vector<192x64xf32>, vector<64x8xf32>, vector<192x8xf32> -> vector<192x8xf32>
    %6 = vector.extract_strided_slice %3 {offsets = [0, 0], sizes = [48, 8], strides = [1, 1]} : vector<192x8xf32> to vector<48x8xf32>
    %7 = vector.extract_strided_slice %3 {offsets = [48, 0], sizes = [48, 8], strides = [1, 1]} : vector<192x8xf32> to vector<48x8xf32>
    %8 = vector.extract_strided_slice %3 {offsets = [96, 0], sizes = [48, 8], strides = [1, 1]} : vector<192x8xf32> to vector<48x8xf32>
    %9 = vector.extract_strided_slice %3 {offsets = [144, 0], sizes = [48, 8], strides = [1, 1]} : vector<192x8xf32> to vector<48x8xf32>
    %10 = tpu.concatenate %6, %7, %8, %9 in 1 : vector<48x8xf32>, vector<48x8xf32>, vector<48x8xf32>, vector<48x8xf32> -> vector<48x32xf32>
    %11 = vector.extract_strided_slice %5 {offsets = [0, 0], sizes = [48, 8], strides = [1, 1]} : vector<192x8xf32> to vector<48x8xf32>
    %12 = vector.extract_strided_slice %5 {offsets = [48, 0], sizes = [48, 8], strides = [1, 1]} : vector<192x8xf32> to vector<48x8xf32>
    %13 = vector.extract_strided_slice %5 {offsets = [96, 0], sizes = [48, 8], strides = [1, 1]} : vector<192x8xf32> to vector<48x8xf32>
    %14 = vector.extract_strided_slice %5 {offsets = [144, 0], sizes = [48, 8], strides = [1, 1]} : vector<192x8xf32> to vector<48x8xf32>
    %15 = tpu.concatenate %11, %12, %13, %14 in 1 : vector<48x8xf32>, vector<48x8xf32>, vector<48x8xf32>, vector<48x8xf32> -> vector<48x32xf32>
    %c0_7 = arith.constant 0 : index
    %c0_8 = arith.constant 0 : index
    %16 = vector.load %arg2[%c0_7, %c0_8] : memref<48x48xf32, #tpu.memory_space<vmem>>, vector<48x48xf32>
    %cst_9 = arith.constant dense<0.000000e+00> : vector<48x32xf32>
    %17 = tpu.matmul %16, %10, %cst_9 {dimension_numbers = #tpu.dot_dimension_numbers<[1], [0], [0], [1], [0, 0, 1, 1], [], []>} : vector<48x48xf32>, vector<48x32xf32>, vector<48x32xf32> -> vector<48x32xf32>
    %c0_10 = arith.constant 0 : index
    %c0_11 = arith.constant 0 : index
    %18 = vector.load %arg3[%c0_10, %c0_11] : memref<48x1xf32, #tpu.memory_space<vmem>>, vector<48x1xf32>
    %19 = vector.broadcast %18 : vector<48x1xf32> to vector<48x32xf32>
    %20 = arith.addf %17, %19 : vector<48x32xf32>
    %cst_12 = arith.constant 0.000000e+00 : f32
    %21 = vector.broadcast %cst_12 : f32 to vector<48x32xf32>
    %22 = arith.maximumf %20, %21 : vector<48x32xf32>
    %c0_13 = arith.constant 0 : index
    %c0_14 = arith.constant 0 : index
    %23 = vector.load %arg2[%c0_13, %c0_14] : memref<48x48xf32, #tpu.memory_space<vmem>>, vector<48x48xf32>
    %cst_15 = arith.constant dense<0.000000e+00> : vector<48x32xf32>
    %24 = tpu.matmul %23, %15, %cst_15 {dimension_numbers = #tpu.dot_dimension_numbers<[1], [0], [0], [1], [0, 0, 1, 1], [], []>} : vector<48x48xf32>, vector<48x32xf32>, vector<48x32xf32> -> vector<48x32xf32>
    %c0_16 = arith.constant 0 : index
    %c0_17 = arith.constant 0 : index
    %25 = vector.load %arg3[%c0_16, %c0_17] : memref<48x1xf32, #tpu.memory_space<vmem>>, vector<48x1xf32>
    %26 = vector.broadcast %25 : vector<48x1xf32> to vector<48x32xf32>
    %27 = arith.addf %24, %26 : vector<48x32xf32>
    %cst_18 = arith.constant 0.000000e+00 : f32
    %28 = vector.broadcast %cst_18 : f32 to vector<48x32xf32>
    %29 = arith.maximumf %27, %28 : vector<48x32xf32>
    %c0_19 = arith.constant 0 : index
    %c0_20 = arith.constant 0 : index
    %30 = vector.load %arg4[%c0_19, %c0_20] : memref<48x48xf32, #tpu.memory_space<vmem>>, vector<48x48xf32>
    %cst_21 = arith.constant dense<0.000000e+00> : vector<48x32xf32>
    %31 = tpu.matmul %30, %22, %cst_21 {dimension_numbers = #tpu.dot_dimension_numbers<[1], [0], [0], [1], [0, 0, 1, 1], [], []>} : vector<48x48xf32>, vector<48x32xf32>, vector<48x32xf32> -> vector<48x32xf32>
    %c0_22 = arith.constant 0 : index
    %c0_23 = arith.constant 0 : index
    %32 = vector.load %arg5[%c0_22, %c0_23] : memref<48x1xf32, #tpu.memory_space<vmem>>, vector<48x1xf32>
    %33 = vector.broadcast %32 : vector<48x1xf32> to vector<48x32xf32>
    %34 = arith.addf %31, %33 : vector<48x32xf32>
    %cst_24 = arith.constant 0.000000e+00 : f32
    %35 = vector.broadcast %cst_24 : f32 to vector<48x32xf32>
    %36 = arith.maximumf %34, %35 : vector<48x32xf32>
    %c0_25 = arith.constant 0 : index
    %c0_26 = arith.constant 0 : index
    %37 = vector.load %arg6[%c0_25, %c0_26] : memref<48x48xf32, #tpu.memory_space<vmem>>, vector<48x48xf32>
    %cst_27 = arith.constant dense<0.000000e+00> : vector<48x32xf32>
    %38 = tpu.matmul %37, %29, %cst_27 {dimension_numbers = #tpu.dot_dimension_numbers<[1], [0], [0], [1], [0, 0, 1, 1], [], []>} : vector<48x48xf32>, vector<48x32xf32>, vector<48x32xf32> -> vector<48x32xf32>
    %c0_28 = arith.constant 0 : index
    %c0_29 = arith.constant 0 : index
    %39 = vector.load %arg7[%c0_28, %c0_29] : memref<48x1xf32, #tpu.memory_space<vmem>>, vector<48x1xf32>
    %40 = vector.broadcast %39 : vector<48x1xf32> to vector<48x32xf32>
    %41 = arith.addf %38, %40 : vector<48x32xf32>
    %cst_30 = arith.constant 0.000000e+00 : f32
    %42 = vector.broadcast %cst_30 : f32 to vector<48x32xf32>
    %43 = arith.maximumf %41, %42 : vector<48x32xf32>
    %c0_31 = arith.constant 0 : index
    %c0_32 = arith.constant 0 : index
    %44 = vector.load %arg17[%c0_31, %c0_32] : memref<32x4xf32, #tpu.memory_space<vmem>>, vector<32x4xf32>
    %cst_33 = arith.constant dense<0.000000e+00> : vector<48x4xf32>
    %45 = tpu.matmul %22, %44, %cst_33 {dimension_numbers = #tpu.dot_dimension_numbers<[1], [0], [0], [1], [0, 0, 1, 1], [], []>} : vector<48x32xf32>, vector<32x4xf32>, vector<48x4xf32> -> vector<48x4xf32>
    %c0_34 = arith.constant 0 : index
    %c0_35 = arith.constant 0 : index
    %46 = vector.load %arg18[%c0_34, %c0_35] : memref<32x4xf32, #tpu.memory_space<vmem>>, vector<32x4xf32>
    %cst_36 = arith.constant dense<0.000000e+00> : vector<48x4xf32>
    %47 = tpu.matmul %29, %46, %cst_36 {dimension_numbers = #tpu.dot_dimension_numbers<[1], [0], [0], [1], [0, 0, 1, 1], [], []>} : vector<48x32xf32>, vector<32x4xf32>, vector<48x4xf32> -> vector<48x4xf32>
    %48 = arith.addf %45, %47 : vector<48x4xf32>
    %cst_37 = arith.constant 6.250000e-02 : f32
    %49 = vector.broadcast %cst_37 : f32 to vector<48x4xf32>
    %50 = arith.mulf %48, %49 : vector<48x4xf32>
    %c0_38 = arith.constant 0 : index
    %c0_39 = arith.constant 0 : index
    %51 = vector.load %arg8[%c0_38, %c0_39] : memref<48x1xf32, #tpu.memory_space<vmem>>, vector<48x1xf32>
    %52 = vector.broadcast %51 : vector<48x1xf32> to vector<48x4xf32>
    %53 = arith.mulf %50, %52 : vector<48x4xf32>
    %c0_40 = arith.constant 0 : index
    %c0_41 = arith.constant 0 : index
    %54 = vector.load %arg9[%c0_40, %c0_41] : memref<3x48xf32, #tpu.memory_space<vmem>>, vector<3x48xf32>
    %cst_42 = arith.constant dense<0.000000e+00> : vector<3x4xf32>
    %55 = tpu.matmul %54, %53, %cst_42 {dimension_numbers = #tpu.dot_dimension_numbers<[1], [0], [0], [1], [0, 0, 1, 1], [], []>} : vector<3x48xf32>, vector<48x4xf32>, vector<3x4xf32> -> vector<3x4xf32>
    %c0_43 = arith.constant 0 : index
    %c0_44 = arith.constant 0 : index
    %56 = vector.load %arg10[%c0_43, %c0_44] : memref<3x1xf32, #tpu.memory_space<vmem>>, vector<3x1xf32>
    %57 = vector.broadcast %56 : vector<3x1xf32> to vector<3x4xf32>
    %58 = arith.addf %55, %57 : vector<3x4xf32>
    %cst_45 = arith.constant 0.000000e+00 : f32
    %59 = vector.broadcast %cst_45 : f32 to vector<3x4xf32>
    %60 = arith.maximumf %58, %59 : vector<3x4xf32>
    %c0_46 = arith.constant 0 : index
    %c0_47 = arith.constant 0 : index
    %61 = vector.load %arg11[%c0_46, %c0_47] : memref<48x3xf32, #tpu.memory_space<vmem>>, vector<48x3xf32>
    %cst_48 = arith.constant dense<0.000000e+00> : vector<48x4xf32>
    %62 = tpu.matmul %61, %60, %cst_48 {dimension_numbers = #tpu.dot_dimension_numbers<[1], [0], [0], [1], [0, 0, 1, 1], [], []>} : vector<48x3xf32>, vector<3x4xf32>, vector<48x4xf32> -> vector<48x4xf32>
    %c0_49 = arith.constant 0 : index
    %c0_50 = arith.constant 0 : index
    %63 = vector.load %arg12[%c0_49, %c0_50] : memref<48x1xf32, #tpu.memory_space<vmem>>, vector<48x1xf32>
    %64 = vector.broadcast %63 : vector<48x1xf32> to vector<48x4xf32>
    %65 = arith.addf %62, %64 : vector<48x4xf32>
    %66 = vector.extract_strided_slice %36 {offsets = [0, 0], sizes = [48, 8], strides = [1, 1]} : vector<48x32xf32> to vector<48x8xf32>
    %67 = vector.extract_strided_slice %36 {offsets = [0, 8], sizes = [48, 8], strides = [1, 1]} : vector<48x32xf32> to vector<48x8xf32>
    %68 = vector.extract_strided_slice %36 {offsets = [0, 16], sizes = [48, 8], strides = [1, 1]} : vector<48x32xf32> to vector<48x8xf32>
    %69 = vector.extract_strided_slice %36 {offsets = [0, 24], sizes = [48, 8], strides = [1, 1]} : vector<48x32xf32> to vector<48x8xf32>
    %70 = tpu.concatenate %66, %67, %68, %69 in 0 : vector<48x8xf32>, vector<48x8xf32>, vector<48x8xf32>, vector<48x8xf32> -> vector<192x8xf32>
    %71 = vector.extract_strided_slice %43 {offsets = [0, 0], sizes = [48, 8], strides = [1, 1]} : vector<48x32xf32> to vector<48x8xf32>
    %72 = vector.extract_strided_slice %43 {offsets = [0, 8], sizes = [48, 8], strides = [1, 1]} : vector<48x32xf32> to vector<48x8xf32>
    %73 = vector.extract_strided_slice %43 {offsets = [0, 16], sizes = [48, 8], strides = [1, 1]} : vector<48x32xf32> to vector<48x8xf32>
    %74 = vector.extract_strided_slice %43 {offsets = [0, 24], sizes = [48, 8], strides = [1, 1]} : vector<48x32xf32> to vector<48x8xf32>
    %75 = tpu.concatenate %71, %72, %73, %74 in 0 : vector<48x8xf32>, vector<48x8xf32>, vector<48x8xf32>, vector<48x8xf32> -> vector<192x8xf32>
    %76 = vector.extract_strided_slice %65 {offsets = [0, 0], sizes = [48, 1], strides = [1, 1]} : vector<48x4xf32> to vector<48x1xf32>
    %77 = vector.extract_strided_slice %65 {offsets = [0, 1], sizes = [48, 1], strides = [1, 1]} : vector<48x4xf32> to vector<48x1xf32>
    %78 = vector.extract_strided_slice %65 {offsets = [0, 2], sizes = [48, 1], strides = [1, 1]} : vector<48x4xf32> to vector<48x1xf32>
    %79 = vector.extract_strided_slice %65 {offsets = [0, 3], sizes = [48, 1], strides = [1, 1]} : vector<48x4xf32> to vector<48x1xf32>
    %80 = tpu.concatenate %76, %77, %78, %79 in 0 : vector<48x1xf32>, vector<48x1xf32>, vector<48x1xf32>, vector<48x1xf32> -> vector<192x1xf32>
    %c0_51 = arith.constant 0 : index
    %c0_52 = arith.constant 0 : index
    %81 = vector.load %arg15[%c0_51, %c0_52] : memref<8x64xf32, #tpu.memory_space<vmem>>, vector<8x64xf32>
    %cst_53 = arith.constant dense<0.000000e+00> : vector<192x64xf32>
    %82 = tpu.matmul %70, %81, %cst_53 {dimension_numbers = #tpu.dot_dimension_numbers<[1], [0], [0], [1], [0, 0, 1, 1], [], []>} : vector<192x8xf32>, vector<8x64xf32>, vector<192x64xf32> -> vector<192x64xf32>
    %c0_54 = arith.constant 0 : index
    %c0_55 = arith.constant 0 : index
    %83 = vector.load %arg16[%c0_54, %c0_55] : memref<8x64xf32, #tpu.memory_space<vmem>>, vector<8x64xf32>
    %cst_56 = arith.constant dense<0.000000e+00> : vector<192x64xf32>
    %84 = tpu.matmul %75, %83, %cst_56 {dimension_numbers = #tpu.dot_dimension_numbers<[1], [0], [0], [1], [0, 0, 1, 1], [], []>} : vector<192x8xf32>, vector<8x64xf32>, vector<192x64xf32> -> vector<192x64xf32>
    %85 = arith.mulf %82, %84 : vector<192x64xf32>
    %86 = arith.negf %85 : vector<192x64xf32>
    %87 = math.exp %86 : vector<192x64xf32>
    %cst_57 = arith.constant 1.000000e+00 : f32
    %88 = vector.broadcast %cst_57 : f32 to vector<192x64xf32>
    %89 = arith.addf %88, %87 : vector<192x64xf32>
    %90 = arith.divf %88, %89 : vector<192x64xf32>
    %91 = vector.broadcast %80 : vector<192x1xf32> to vector<192x64xf32>
    %92 = arith.addf %90, %91 : vector<192x64xf32>
    %93 = arith.mulf %1, %92 : vector<192x64xf32>
    %94 = vector.shape_cast %93 : vector<192x64xf32> to vector<4x48x64xf32>
    %c0_58 = arith.constant 0 : index
    %c0_59 = arith.constant 0 : index
    %c0_60 = arith.constant 0 : index
    %95 = vector.load %arg19[%c0_58, %c0_59, %c0_60] : memref<4x48x64xf32, #tpu.memory_space<vmem>>, vector<4x48x64xf32>
    tpu.vector_store %arg19[%c0_58, %c0_59, %c0_60], %94 {strides = array<i32>} : memref<4x48x64xf32, #tpu.memory_space<vmem>>, vector<4x48x64xf32>,
    return
  }
  func.func @transform_0(%arg0: i32) -> (i32, i32, i32) {
    %c0_i32 = arith.constant 0 : i32
    %c0_i32_0 = arith.constant 0 : i32
    %c0_i32_1 = arith.constant 0 : i32
    return %arg0, %c0_i32, %c0_i32_0 : i32, i32, i32
  }
  func.func @transform_1(%arg0: i32) -> (i32, i32) {
    %c0_i32 = arith.constant 0 : i32
    %c0_i32_0 = arith.constant 0 : i32
    %c0_i32_1 = arith.constant 0 : i32
    return %c0_i32, %c0_i32_0 : i32, i32
  }
  func.func @transform_2(%arg0: i32) -> (i32, i32) {
    %c0_i32 = arith.constant 0 : i32
    %c0_i32_0 = arith.constant 0 : i32
    %c0_i32_1 = arith.constant 0 : i32
    return %c0_i32, %c0_i32_0 : i32, i32
  }
  func.func @transform_3(%arg0: i32) -> (i32, i32) {
    %c0_i32 = arith.constant 0 : i32
    %c0_i32_0 = arith.constant 0 : i32
    %c0_i32_1 = arith.constant 0 : i32
    return %c0_i32, %c0_i32_0 : i32, i32
  }
  func.func @transform_4(%arg0: i32) -> (i32, i32) {
    %c0_i32 = arith.constant 0 : i32
    %c0_i32_0 = arith.constant 0 : i32
    %c0_i32_1 = arith.constant 0 : i32
    return %c0_i32, %c0_i32_0 : i32, i32
  }
  func.func @transform_5(%arg0: i32) -> (i32, i32) {
    %c0_i32 = arith.constant 0 : i32
    %c0_i32_0 = arith.constant 0 : i32
    %c0_i32_1 = arith.constant 0 : i32
    return %c0_i32, %c0_i32_0 : i32, i32
  }
  func.func @transform_6(%arg0: i32) -> (i32, i32) {
    %c0_i32 = arith.constant 0 : i32
    %c0_i32_0 = arith.constant 0 : i32
    %c0_i32_1 = arith.constant 0 : i32
    return %c0_i32, %c0_i32_0 : i32, i32
  }
  func.func @transform_7(%arg0: i32) -> (i32, i32) {
    %c0_i32 = arith.constant 0 : i32
    %c0_i32_0 = arith.constant 0 : i32
    %c0_i32_1 = arith.constant 0 : i32
    return %c0_i32, %c0_i32_0 : i32, i32
  }
  func.func @transform_8(%arg0: i32) -> (i32, i32) {
    %c0_i32 = arith.constant 0 : i32
    %c0_i32_0 = arith.constant 0 : i32
    %c0_i32_1 = arith.constant 0 : i32
    return %c0_i32, %c0_i32_0 : i32, i32
  }
  func.func @transform_9(%arg0: i32) -> (i32, i32) {
    %c0_i32 = arith.constant 0 : i32
    %c0_i32_0 = arith.constant 0 : i32
    %c0_i32_1 = arith.constant 0 : i32
    return %c0_i32, %c0_i32_0 : i32, i32
  }
  func.func @transform_10(%arg0: i32) -> (i32, i32) {
    %c0_i32 = arith.constant 0 : i32
    %c0_i32_0 = arith.constant 0 : i32
    %c0_i32_1 = arith.constant 0 : i32
    return %c0_i32, %c0_i32_0 : i32, i32
  }
  func.func @transform_11(%arg0: i32) -> (i32, i32) {
    %c0_i32 = arith.constant 0 : i32
    %c0_i32_0 = arith.constant 0 : i32
    %c0_i32_1 = arith.constant 0 : i32
    return %c0_i32, %c0_i32_0 : i32, i32
  }
  func.func @transform_12(%arg0: i32) -> (i32, i32) {
    %c0_i32 = arith.constant 0 : i32
    %c0_i32_0 = arith.constant 0 : i32
    %c0_i32_1 = arith.constant 0 : i32
    return %c0_i32, %c0_i32_0 : i32, i32
  }
  func.func @transform_13(%arg0: i32) -> (i32, i32) {
    %c0_i32 = arith.constant 0 : i32
    %c0_i32_0 = arith.constant 0 : i32
    %c0_i32_1 = arith.constant 0 : i32
    return %c0_i32, %c0_i32_0 : i32, i32
  }
  func.func @transform_14(%arg0: i32) -> (i32, i32) {
    %c0_i32 = arith.constant 0 : i32
    %c0_i32_0 = arith.constant 0 : i32
    %c0_i32_1 = arith.constant 0 : i32
    return %c0_i32, %c0_i32_0 : i32, i32
  }
  func.func @transform_15(%arg0: i32) -> (i32, i32) {
    %c0_i32 = arith.constant 0 : i32
    %c0_i32_0 = arith.constant 0 : i32
    %c0_i32_1 = arith.constant 0 : i32
    return %c0_i32, %c0_i32_0 : i32, i32
  }
  func.func @transform_16(%arg0: i32) -> (i32, i32) {
    %c0_i32 = arith.constant 0 : i32
    %c0_i32_0 = arith.constant 0 : i32
    %c0_i32_1 = arith.constant 0 : i32
    return %c0_i32, %c0_i32_0 : i32, i32
  }
  func.func @transform_17(%arg0: i32) -> (i32, i32) {
    %c0_i32 = arith.constant 0 : i32
    %c0_i32_0 = arith.constant 0 : i32
    %c0_i32_1 = arith.constant 0 : i32
    return %c0_i32, %c0_i32_0 : i32, i32
  }
  func.func @transform_18(%arg0: i32) -> (i32, i32, i32) {
    %c0_i32 = arith.constant 0 : i32
    %c0_i32_0 = arith.constant 0 : i32
    %c0_i32_1 = arith.constant 0 : i32
    return %arg0, %c0_i32, %c0_i32_0 : i32, i32, i32
  }
}

</mosaic_0001>

<llo_original>
// kernel: tpu_custom_call.1
$region0: #{tpu_custom_call.1}
  #allocation0 [shape = 'u32[]', space=smem, size = 0x4, offset = 0x4, fixed_abs, tag = 'smem constant byte address 0x4 - core index']
  #allocation1 [shape = 'u32[72,128]{1,0:T(1,128)}', space=vmem, size = 0x9000, scoped, tag = 'internal scratch']
  %s0 = inlined_call_operand.hbm [shape: f32[8,48,64], index: 0, kind: input, shape index: {}]
  %s1 = inlined_call_operand.vmem [shape: f32[48,48], index: 1, kind: input, shape index: {}]
  %s2 = inlined_call_operand.vmem [shape: f32[48,1], index: 2, kind: input, shape index: {}]
  %s3 = inlined_call_operand.vmem [shape: f32[48,48], index: 3, kind: input, shape index: {}]
  %s4 = inlined_call_operand.vmem [shape: f32[48,1], index: 4, kind: input, shape index: {}]
  %s5 = inlined_call_operand.vmem [shape: f32[48,48], index: 5, kind: input, shape index: {}]
  %s6 = inlined_call_operand.vmem [shape: f32[48,1], index: 6, kind: input, shape index: {}]
  %s7 = inlined_call_operand.vmem [shape: f32[48,1], index: 7, kind: input, shape index: {}]
  %s8 = inlined_call_operand.vmem [shape: f32[3,48], index: 8, kind: input, shape index: {}]
  %s9 = inlined_call_operand.vmem [shape: f32[3,1], index: 9, kind: input, shape index: {}]
  %s10 = inlined_call_operand.vmem [shape: f32[48,3], index: 10, kind: input, shape index: {}]
  %s11 = inlined_call_operand.vmem [shape: f32[48,1], index: 11, kind: input, shape index: {}]
  %s12 = inlined_call_operand.vmem [shape: f32[64,8], index: 12, kind: input, shape index: {}]
  %s13 = inlined_call_operand.vmem [shape: f32[64,8], index: 13, kind: input, shape index: {}]
  %s14 = inlined_call_operand.vmem [shape: f32[8,64], index: 14, kind: input, shape index: {}]
  %s15 = inlined_call_operand.vmem [shape: f32[8,64], index: 15, kind: input, shape index: {}]
  %s16 = inlined_call_operand.vmem [shape: f32[32,4], index: 16, kind: input, shape index: {}]
  %s17 = inlined_call_operand.vmem [shape: f32[32,4], index: 17, kind: input, shape index: {}]
  %s18 = inlined_call_operand.hbm [shape: f32[8,48,64], index: 18, kind: output, shape index: {}]
  %s19 = sld [smem:[#allocation0]]
  $region109: #{tpu_custom_call.1} parent=0
    _
  %s21 = ssub.s32 1, %s19
  %s22 = scalar_select 0, %s21, %s19
  $region1: #{tpu_custom_call.1} parent=0
    #allocation2 [shape = 'u8[196608]{0}', space=vmem, size = 0x30000, scoped, tag = 'input window, operand 0']
    #allocation3 [shape = 's32[2]{0}', space=sflag, size = 0x8, scoped, tag = 'scoped memory for tpu_custom_call.1']
    #allocation4 [shape = 's32[2]{0}', space=sflag, size = 0x8, scoped, tag = 'scoped memory for tpu_custom_call.1']
    #allocation5 [shape = 'u8[196608]{0}', space=vmem, size = 0x30000, scoped, tag = 'output window, operand 0']
    %23 = vsyncpa [#allocation3], 0
    %s24 = scalar_lea.sflag [#allocation3], 1
    %25 = vsyncpa %s24, 0
    %26 = vsyncpa [#allocation4], 0
    %s27 = scalar_lea.sflag [#allocation4], 1
    %28 = vsyncpa %s27, 0
    loop: start=0, step=1, limit=4
    $region2: #{tpu_custom_call.1} parent=1 // loop_pre_header
      _
    $region3: #{tpu_custom_call.1} parent=1 // loop_header
      %s30 = sphi 0, %s34
      %p31 = scmp.ge.s32.totalorder %s30, 4
      %s40 = sphi 0, %s42
      %s43 = sphi 0, %s40
      %s44 = sphi 0, %s43
      %s60 = sphi 0, %s44
      %s64 = sphi 0, %s64
      %s66 = sphi 0, %s64
      %s67 = sphi 0, %s66
      %s81 = sphi 0, %s67
      %s85 = sphi 0, %s85
      %s87 = sphi 0, %s85
      %s88 = sphi 0, %s87
      %s102 = sphi 0, %s88
      %s106 = sphi 0, %s106
      %s108 = sphi 0, %s106
      %s109 = sphi 0, %s108
      %s123 = sphi 0, %s109
      %s127 = sphi 0, %s127
      %s129 = sphi 0, %s127
      %s130 = sphi 0, %s129
      %s144 = sphi 0, %s130
      %s148 = sphi 0, %s148
      %s150 = sphi 0, %s148
      %s151 = sphi 0, %s150
      %s165 = sphi 0, %s151
      %s169 = sphi 0, %s169
      %s171 = sphi 0, %s169
      %s172 = sphi 0, %s171
      %s186 = sphi 0, %s172
      %s190 = sphi 0, %s190
      %s192 = sphi 0, %s190
      %s193 = sphi 0, %s192
      %s207 = sphi 0, %s193
      %s211 = sphi 0, %s211
      %s213 = sphi 0, %s211
      %s214 = sphi 0, %s213
      %s228 = sphi 0, %s214
      %s232 = sphi 0, %s232
      %s234 = sphi 0, %s232
      %s235 = sphi 0, %s234
      %s249 = sphi 0, %s235
      %s253 = sphi 0, %s253
      %s255 = sphi 0, %s253
      %s256 = sphi 0, %s255
      %s270 = sphi 0, %s256
      %s274 = sphi 0, %s274
      %s276 = sphi 0, %s274
      %s277 = sphi 0, %s276
      %s291 = sphi 0, %s277
      %s295 = sphi 0, %s295
      %s297 = sphi 0, %s295
      %s298 = sphi 0, %s297
      %s312 = sphi 0, %s298
      %s316 = sphi 0, %s316
      %s318 = sphi 0, %s316
      %s319 = sphi 0, %s318
      %s333 = sphi 0, %s319
      %s337 = sphi 0, %s337
      %s339 = sphi 0, %s337
      %s340 = sphi 0, %s339
      %s354 = sphi 0, %s340
      %s358 = sphi 0, %s358
      %s360 = sphi 0, %s358
      %s361 = sphi 0, %s360
      %s375 = sphi 0, %s361
      %s379 = sphi 0, %s379
      %s381 = sphi 0, %s379
      %s382 = sphi 0, %s381
      %s396 = sphi 0, %s382
      %s400 = sphi 0, %s400
      %s402 = sphi 0, %s400
      %s403 = sphi 0, %s402
      %s417 = sphi 0, %s403
      %s423 = sphi 0, %s425
      %s426 = sphi 0, %s423
      %s427 = sphi 0, %s426
      %s443 = sphi 0, %s427
    $region4: #{tpu_custom_call.1} parent=1 // loop_header_branch
      %33 = sbr.rel (%p31) target = $region8
    $region5: #{tpu_custom_call.1} parent=1 // loop_body
      %s35 = ssub.s32 %s30, 1
      %s36 = ssub.s32 %s30, 2
      %s37 = sadd.s32 %s30, 1
      %s38 = ssub.s32 %s30, %s37
      %p39 = scmp.eq.s32.totalorder %s38, 0
      %s41 = sadd.s32 %s40, 1
      %s42 = scalar_select %p39, %s40, %s41
      %p45 = pneg %p39
      %p46 = scmp.eq.s32.totalorder %s30, 1
      %p47 = por %p45, %p46
      %p48 = scmp.ne.s32.totalorder %s40, %s43
      %p49 = scmp.eq.s32.totalorder %s30, 0
      %p50 = por %p48, %p49
      %p51 = scmp.ne.s32.totalorder %s40, %s43
      %p52 = scmp.eq.s32.totalorder %s35, 1
      %p53 = por %p51, %p52
      %p54 = scmp.ne.s32.totalorder %s43, %s44
      %p55 = scmp.eq.s32.totalorder %s35, 0
      %p56 = por %p54, %p55
      %p57 = scmp.ne.s32.totalorder %s43, %s44
      %p58 = scmp.eq.s32.totalorder %s36, 1
      %p59 = por %p57, %p58
      %p61 = scmp.ne.s32.totalorder %s44, %s60
      %p62 = scmp.eq.s32.totalorder %s36, 0
      %p63 = por %p61, %p62
      %s65 = sadd.s32 %s64, 1
      %p68 = scmp.eq.s32.totalorder %s30, 1
      %p69 = scmp.ne.s32.totalorder %s64, %s66
      %p70 = scmp.eq.s32.totalorder %s30, 0
      %p71 = por %p69, %p70
      %p72 = scmp.ne.s32.totalorder %s64, %s66
      %p73 = scmp.eq.s32.totalorder %s35, 1
      %p74 = por %p72, %p73
      %p75 = scmp.ne.s32.totalorder %s66, %s67
      %p76 = scmp.eq.s32.totalorder %s35, 0
      %p77 = por %p75, %p76
      %p78 = scmp.ne.s32.totalorder %s66, %s67
      %p79 = scmp.eq.s32.totalorder %s36, 1
      %p80 = por %p78, %p79
      %p82 = scmp.ne.s32.totalorder %s67, %s81
      %p83 = scmp.eq.s32.totalorder %s36, 0
      %p84 = por %p82, %p83
      %s86 = sadd.s32 %s85, 1
      %p89 = scmp.eq.s32.totalorder %s30, 1
      %p90 = scmp.ne.s32.totalorder %s85, %s87
      %p91 = scmp.eq.s32.totalorder %s30, 0
      %p92 = por %p90, %p91
      %p93 = scmp.ne.s32.totalorder %s85, %s87
      %p94 = scmp.eq.s32.totalorder %s35, 1
      %p95 = por %p93, %p94
      %p96 = scmp.ne.s32.totalorder %s87, %s88
      %p97 = scmp.eq.s32.totalorder %s35, 0
      %p98 = por %p96, %p97
      %p99 = scmp.ne.s32.totalorder %s87, %s88
      %p100 = scmp.eq.s32.totalorder %s36, 1
      %p101 = por %p99, %p100
      %p103 = scmp.ne.s32.totalorder %s88, %s102
      %p104 = scmp.eq.s32.totalorder %s36, 0
      %p105 = por %p103, %p104
      %s107 = sadd.s32 %s106, 1
      %p110 = scmp.eq.s32.totalorder %s30, 1
      %p111 = scmp.ne.s32.totalorder %s106, %s108
      %p112 = scmp.eq.s32.totalorder %s30, 0
      %p113 = por %p111, %p112
      %p114 = scmp.ne.s32.totalorder %s106, %s108
      %p115 = scmp.eq.s32.totalorder %s35, 1
      %p116 = por %p114, %p115
      %p117 = scmp.ne.s32.totalorder %s108, %s109
      %p118 = scmp.eq.s32.totalorder %s35, 0
      %p119 = por %p117, %p118
      %p120 = scmp.ne.s32.totalorder %s108, %s109
      %p121 = scmp.eq.s32.totalorder %s36, 1
      %p122 = por %p120, %p121
      %p124 = scmp.ne.s32.totalorder %s109, %s123
      %p125 = scmp.eq.s32.totalorder %s36, 0
      %p126 = por %p124, %p125
      %s128 = sadd.s32 %s127, 1
      %p131 = scmp.eq.s32.totalorder %s30, 1
      %p132 = scmp.ne.s32.totalorder %s127, %s129
      %p133 = scmp.eq.s32.totalorder %s30, 0
      %p134 = por %p132, %p133
      %p135 = scmp.ne.s32.totalorder %s127, %s129
      %p136 = scmp.eq.s32.totalorder %s35, 1
      %p137 = por %p135, %p136
      %p138 = scmp.ne.s32.totalorder %s129, %s130
      %p139 = scmp.eq.s32.totalorder %s35, 0
      %p140 = por %p138, %p139
      %p141 = scmp.ne.s32.totalorder %s129, %s130
      %p142 = scmp.eq.s32.totalorder %s36, 1
      %p143 = por %p141, %p142
      %p145 = scmp.ne.s32.totalorder %s130, %s144
      %p146 = scmp.eq.s32.totalorder %s36, 0
      %p147 = por %p145, %p146
      %s149 = sadd.s32 %s148, 1
      %p152 = scmp.eq.s32.totalorder %s30, 1
      %p153 = scmp.ne.s32.totalorder %s148, %s150
      %p154 = scmp.eq.s32.totalorder %s30, 0
      %p155 = por %p153, %p154
      %p156 = scmp.ne.s32.totalorder %s148, %s150
      %p157 = scmp.eq.s32.totalorder %s35, 1
      %p158 = por %p156, %p157
      %p159 = scmp.ne.s32.totalorder %s150, %s151
      %p160 = scmp.eq.s32.totalorder %s35, 0
      %p161 = por %p159, %p160
      %p162 = scmp.ne.s32.totalorder %s150, %s151
      %p163 = scmp.eq.s32.totalorder %s36, 1
      %p164 = por %p162, %p163
      %p166 = scmp.ne.s32.totalorder %s151, %s165
      %p167 = scmp.eq.s32.totalorder %s36, 0
      %p168 = por %p166, %p167
      %s170 = sadd.s32 %s169, 1
      %p173 = scmp.eq.s32.totalorder %s30, 1
      %p174 = scmp.ne.s32.totalorder %s169, %s171
      %p175 = scmp.eq.s32.totalorder %s30, 0
      %p176 = por %p174, %p175
      %p177 = scmp.ne.s32.totalorder %s169, %s171
      %p178 = scmp.eq.s32.totalorder %s35, 1
      %p179 = por %p177, %p178
      %p180 = scmp.ne.s32.totalorder %s171, %s172
      %p181 = scmp.eq.s32.totalorder %s35, 0
      %p182 = por %p180, %p181
      %p183 = scmp.ne.s32.totalorder %s171, %s172
      %p184 = scmp.eq.s32.totalorder %s36, 1
      %p185 = por %p183, %p184
      %p187 = scmp.ne.s32.totalorder %s172, %s186
      %p188 = scmp.eq.s32.totalorder %s36, 0
      %p189 = por %p187, %p188
      %s191 = sadd.s32 %s190, 1
      %p194 = scmp.eq.s32.totalorder %s30, 1
      %p195 = scmp.ne.s32.totalorder %s190, %s192
      %p196 = scmp.eq.s32.totalorder %s30, 0
      %p197 = por %p195, %p196
      %p198 = scmp.ne.s32.totalorder %s190, %s192
      %p199 = scmp.eq.s32.totalorder %s35, 1
      %p200 = por %p198, %p199
      %p201 = scmp.ne.s32.totalorder %s192, %s193
      %p202 = scmp.eq.s32.totalorder %s35, 0
      %p203 = por %p201, %p202
      %p204 = scmp.ne.s32.totalorder %s192, %s193
      %p205 = scmp.eq.s32.totalorder %s36, 1
      %p206 = por %p204, %p205
      %p208 = scmp.ne.s32.totalorder %s193, %s207
      %p209 = scmp.eq.s32.totalorder %s36, 0
      %p210 = por %p208, %p209
      %s212 = sadd.s32 %s211, 1
      %p215 = scmp.eq.s32.totalorder %s30, 1
      %p216 = scmp.ne.s32.totalorder %s211, %s213
      %p217 = scmp.eq.s32.totalorder %s30, 0
      %p218 = por %p216, %p217
      %p219 = scmp.ne.s32.totalorder %s211, %s213
      %p220 = scmp.eq.s32.totalorder %s35, 1
      %p221 = por %p219, %p220
      %p222 = scmp.ne.s32.totalorder %s213, %s214
      %p223 = scmp.eq.s32.totalorder %s35, 0
      %p224 = por %p222, %p223
      %p225 = scmp.ne.s32.totalorder %s213, %s214
      %p226 = scmp.eq.s32.totalorder %s36, 1
      %p227 = por %p225, %p226
      %p229 = scmp.ne.s32.totalorder %s214, %s228
      %p230 = scmp.eq.s32.totalorder %s36, 0
      %p231 = por %p229, %p230
      %s233 = sadd.s32 %s232, 1
      %p236 = scmp.eq.s32.totalorder %s30, 1
      %p237 = scmp.ne.s32.totalorder %s232, %s234
      %p238 = scmp.eq.s32.totalorder %s30, 0
      %p239 = por %p237, %p238
      %p240 = scmp.ne.s32.totalorder %s232, %s234
      %p241 = scmp.eq.s32.totalorder %s35, 1
      %p242 = por %p240, %p241
      %p243 = scmp.ne.s32.totalorder %s234, %s235
      %p244 = scmp.eq.s32.totalorder %s35, 0
      %p245 = por %p243, %p244
      %p246 = scmp.ne.s32.totalorder %s234, %s235
      %p247 = scmp.eq.s32.totalorder %s36, 1
      %p248 = por %p246, %p247
      %p250 = scmp.ne.s32.totalorder %s235, %s249
      %p251 = scmp.eq.s32.totalorder %s36, 0
      %p252 = por %p250, %p251
      %s254 = sadd.s32 %s253, 1
      %p257 = scmp.eq.s32.totalorder %s30, 1
      %p258 = scmp.ne.s32.totalorder %s253, %s255
      %p259 = scmp.eq.s32.totalorder %s30, 0
      %p260 = por %p258, %p259
      %p261 = scmp.ne.s32.totalorder %s253, %s255
      %p262 = scmp.eq.s32.totalorder %s35, 1
      %p263 = por %p261, %p262
      %p264 = scmp.ne.s32.totalorder %s255, %s256
      %p265 = scmp.eq.s32.totalorder %s35, 0
      %p266 = por %p264, %p265
      %p267 = scmp.ne.s32.totalorder %s255, %s256
      %p268 = scmp.eq.s32.totalorder %s36, 1
      %p269 = por %p267, %p268
      %p271 = scmp.ne.s32.totalorder %s256, %s270
      %p272 = scmp.eq.s32.totalorder %s36, 0
      %p273 = por %p271, %p272
      %s275 = sadd.s32 %s274, 1
      %p278 = scmp.eq.s32.totalorder %s30, 1
      %p279 = scmp.ne.s32.totalorder %s274, %s276
      %p280 = scmp.eq.s32.totalorder %s30, 0
      %p281 = por %p279, %p280
      %p282 = scmp.ne.s32.totalorder %s274, %s276
      %p283 = scmp.eq.s32.totalorder %s35, 1
      %p284 = por %p282, %p283
      %p285 = scmp.ne.s32.totalorder %s276, %s277
      %p286 = scmp.eq.s32.totalorder %s35, 0
      %p287 = por %p285, %p286
      %p288 = scmp.ne.s32.totalorder %s276, %s277
      %p289 = scmp.eq.s32.totalorder %s36, 1
      %p290 = por %p288, %p289
      %p292 = scmp.ne.s32.totalorder %s277, %s291
      %p293 = scmp.eq.s32.totalorder %s36, 0
      %p294 = por %p292, %p293
      %s296 = sadd.s32 %s295, 1
      %p299 = scmp.eq.s32.totalorder %s30, 1
      %p300 = scmp.ne.s32.totalorder %s295, %s297
      %p301 = scmp.eq.s32.totalorder %s30, 0
      %p302 = por %p300, %p301
      %p303 = scmp.ne.s32.totalorder %s295, %s297
      %p304 = scmp.eq.s32.totalorder %s35, 1
      %p305 = por %p303, %p304
      %p306 = scmp.ne.s32.totalorder %s297, %s298
      %p307 = scmp.eq.s32.totalorder %s35, 0
      %p308 = por %p306, %p307
      %p309 = scmp.ne.s32.totalorder %s297, %s298
      %p310 = scmp.eq.s32.totalorder %s36, 1
      %p311 = por %p309, %p310
      %p313 = scmp.ne.s32.totalorder %s298, %s312
      %p314 = scmp.eq.s32.totalorder %s36, 0
      %p315 = por %p313, %p314
      %s317 = sadd.s32 %s316, 1
      %p320 = scmp.eq.s32.totalorder %s30, 1
      %p321 = scmp.ne.s32.totalorder %s316, %s318
      %p322 = scmp.eq.s32.totalorder %s30, 0
      %p323 = por %p321, %p322
      %p324 = scmp.ne.s32.totalorder %s316, %s318
      %p325 = scmp.eq.s32.totalorder %s35, 1
      %p326 = por %p324, %p325
      %p327 = scmp.ne.s32.totalorder %s318, %s319
      %p328 = scmp.eq.s32.totalorder %s35, 0
      %p329 = por %p327, %p328
      %p330 = scmp.ne.s32.totalorder %s318, %s319
      %p331 = scmp.eq.s32.totalorder %s36, 1
      %p332 = por %p330, %p331
      %p334 = scmp.ne.s32.totalorder %s319, %s333
      %p335 = scmp.eq.s32.totalorder %s36, 0
      %p336 = por %p334, %p335
      %s338 = sadd.s32 %s337, 1
      %p341 = scmp.eq.s32.totalorder %s30, 1
      %p342 = scmp.ne.s32.totalorder %s337, %s339
      %p343 = scmp.eq.s32.totalorder %s30, 0
      %p344 = por %p342, %p343
      %p345 = scmp.ne.s32.totalorder %s337, %s339
      %p346 = scmp.eq.s32.totalorder %s35, 1
      %p347 = por %p345, %p346
      %p348 = scmp.ne.s32.totalorder %s339, %s340
      %p349 = scmp.eq.s32.totalorder %s35, 0
      %p350 = por %p348, %p349
      %p351 = scmp.ne.s32.totalorder %s339, %s340
      %p352 = scmp.eq.s32.totalorder %s36, 1
      %p353 = por %p351, %p352
      %p355 = scmp.ne.s32.totalorder %s340, %s354
      %p356 = scmp.eq.s32.totalorder %s36, 0
      %p357 = por %p355, %p356
      %s359 = sadd.s32 %s358, 1
      %p362 = scmp.eq.s32.totalorder %s30, 1
      %p363 = scmp.ne.s32.totalorder %s358, %s360
      %p364 = scmp.eq.s32.totalorder %s30, 0
      %p365 = por %p363, %p364
      %p366 = scmp.ne.s32.totalorder %s358, %s360
      %p367 = scmp.eq.s32.totalorder %s35, 1
      %p368 = por %p366, %p367
      %p369 = scmp.ne.s32.totalorder %s360, %s361
      %p370 = scmp.eq.s32.totalorder %s35, 0
      %p371 = por %p369, %p370
      %p372 = scmp.ne.s32.totalorder %s360, %s361
      %p373 = scmp.eq.s32.totalorder %s36, 1
      %p374 = por %p372, %p373
      %p376 = scmp.ne.s32.totalorder %s361, %s375
      %p377 = scmp.eq.s32.totalorder %s36, 0
      %p378 = por %p376, %p377
      %s380 = sadd.s32 %s379, 1
      %p383 = scmp.eq.s32.totalorder %s30, 1
      %p384 = scmp.ne.s32.totalorder %s379, %s381
      %p385 = scmp.eq.s32.totalorder %s30, 0
      %p386 = por %p384, %p385
      %p387 = scmp.ne.s32.totalorder %s379, %s381
      %p388 = scmp.eq.s32.totalorder %s35, 1
      %p389 = por %p387, %p388
      %p390 = scmp.ne.s32.totalorder %s381, %s382
      %p391 = scmp.eq.s32.totalorder %s35, 0
      %p392 = por %p390, %p391
      %p393 = scmp.ne.s32.totalorder %s381, %s382
      %p394 = scmp.eq.s32.totalorder %s36, 1
      %p395 = por %p393, %p394
      %p397 = scmp.ne.s32.totalorder %s382, %s396
      %p398 = scmp.eq.s32.totalorder %s36, 0
      %p399 = por %p397, %p398
      %s401 = sadd.s32 %s400, 1
      %p404 = scmp.eq.s32.totalorder %s30, 1
      %p405 = scmp.ne.s32.totalorder %s400, %s402
      %p406 = scmp.eq.s32.totalorder %s30, 0
      %p407 = por %p405, %p406
      %p408 = scmp.ne.s32.totalorder %s400, %s402
      %p409 = scmp.eq.s32.totalorder %s35, 1
      %p410 = por %p408, %p409
      %p411 = scmp.ne.s32.totalorder %s402, %s403
      %p412 = scmp.eq.s32.totalorder %s35, 0
      %p413 = por %p411, %p412
      %p414 = scmp.ne.s32.totalorder %s402, %s403
      %p415 = scmp.eq.s32.totalorder %s36, 1
      %p416 = por %p414, %p415
      %p418 = scmp.ne.s32.totalorder %s403, %s417
      %p419 = scmp.eq.s32.totalorder %s36, 0
      %p420 = por %p418, %p419
      %s421 = ssub.s32 %s30, %s37
      %p422 = scmp.eq.s32.totalorder %s421, 0
      %s424 = sadd.s32 %s423, 1
      %s425 = scalar_select %p422, %s423, %s424
      %p428 = pneg %p422
      %p429 = scmp.eq.s32.totalorder %s30, 1
      %p430 = por %p428, %p429
      %p431 = scmp.ne.s32.totalorder %s423, %s426
      %p432 = scmp.eq.s32.totalorder %s30, 0
      %p433 = por %p431, %p432
      %p434 = scmp.ne.s32.totalorder %s423, %s426
      %p435 = scmp.eq.s32.totalorder %s35, 1
      %p436 = por %p434, %p435
      %p437 = scmp.ne.s32.totalorder %s426, %s427
      %p438 = scmp.eq.s32.totalorder %s35, 0
      %p439 = por %p437, %p438
      %p440 = scmp.ne.s32.totalorder %s426, %s427
      %p441 = scmp.eq.s32.totalorder %s36, 1
      %p442 = por %p440, %p441
      %p444 = scmp.ne.s32.totalorder %s427, %s443
      %p445 = scmp.eq.s32.totalorder %s36, 0
      %p446 = por %p444, %p445
      %p447 = scmp.le.s32.totalorder 1, %s30
      %p448 = scmp.lt.s32.totalorder %s30, 3
      %p449 = pnand %p447, %p448
      %p450 = pneg %p449
      // Predicated region
      $region9: #{tpu_custom_call.1} parent=5 // pred_check
        _
      $region10: #{tpu_custom_call.1} parent=5 // pred_check_branch
        %452 = sbr.rel (%p449) target = $region12
      $region11: #{tpu_custom_call.1} parent=5 // pred_region
        %s453 = ssub.s32 %s30, 1
        // Predicated region
        $region13: #{tpu_custom_call.1} parent=11 // pred_check
          %p454 = pneg %p77
        $region14: #{tpu_custom_call.1} parent=11 // pred_check_branch
          %456 = sbr.rel (%p454) target = $region16
        $region15: #{tpu_custom_call.1} parent=11 // pred_region
          _
        $region16: #{tpu_custom_call.1} parent=11 // pred_fallthru
          _
        // Predicated region
        $region17: #{tpu_custom_call.1} parent=11 // pred_check
          %p457 = pneg %p98
        $region18: #{tpu_custom_call.1} parent=11 // pred_check_branch
          %459 = sbr.rel (%p457) target = $region20
        $region19: #{tpu_custom_call.1} parent=11 // pred_region
          _
        $region20: #{tpu_custom_call.1} parent=11 // pred_fallthru
          _
        // Predicated region
        $region21: #{tpu_custom_call.1} parent=11 // pred_check
          %p460 = pneg %p119
        $region22: #{tpu_custom_call.1} parent=11 // pred_check_branch
          %462 = sbr.rel (%p460) target = $region24
        $region23: #{tpu_custom_call.1} parent=11 // pred_region
          _
        $region24: #{tpu_custom_call.1} parent=11 // pred_fallthru
          _
        // Predicated region
        $region25: #{tpu_custom_call.1} parent=11 // pred_check
          %p463 = pneg %p140
        $region26: #{tpu_custom_call.1} parent=11 // pred_check_branch
          %465 = sbr.rel (%p463) target = $region28
        $region27: #{tpu_custom_call.1} parent=11 // pred_region
          _
        $region28: #{tpu_custom_call.1} parent=11 // pred_fallthru
          _
        // Predicated region
        $region29: #{tpu_custom_call.1} parent=11 // pred_check
          %p466 = pneg %p161
        $region30: #{tpu_custom_call.1} parent=11 // pred_check_branch
          %468 = sbr.rel (%p466) target = $region32
        $region31: #{tpu_custom_call.1} parent=11 // pred_region
          _
        $region32: #{tpu_custom_call.1} parent=11 // pred_fallthru
          _
        // Predicated region
        $region33: #{tpu_custom_call.1} parent=11 // pred_check
          %p469 = pneg %p182
        $region34: #{tpu_custom_call.1} parent=11 // pred_check_branch
          %471 = sbr.rel (%p469) target = $region36
        $region35: #{tpu_custom_call.1} parent=11 // pred_region
          _
        $region36: #{tpu_custom_call.1} parent=11 // pred_fallthru
          _
        // Predicated region
        $region37: #{tpu_custom_call.1} parent=11 // pred_check
          %p472 = pneg %p203
        $region38: #{tpu_custom_call.1} parent=11 // pred_check_branch
          %474 = sbr.rel (%p472) target = $region40
        $region39: #{tpu_custom_call.1} parent=11 // pred_region
          _
        $region40: #{tpu_custom_call.1} parent=11 // pred_fallthru
          _
        // Predicated region
        $region41: #{tpu_custom_call.1} parent=11 // pred_check
          %p475 = pneg %p224
        $region42: #{tpu_custom_call.1} parent=11 // pred_check_branch
          %477 = sbr.rel (%p475) target = $region44
        $region43: #{tpu_custom_call.1} parent=11 // pred_region
          _
        $region44: #{tpu_custom_call.1} parent=11 // pred_fallthru
          _
        // Predicated region
        $region45: #{tpu_custom_call.1} parent=11 // pred_check
          %p478 = pneg %p245
        $region46: #{tpu_custom_call.1} parent=11 // pred_check_branch
          %480 = sbr.rel (%p478) target = $region48
        $region47: #{tpu_custom_call.1} parent=11 // pred_region
          _
        $region48: #{tpu_custom_call.1} parent=11 // pred_fallthru
          _
        // Predicated region
        $region49: #{tpu_custom_call.1} parent=11 // pred_check
          %p481 = pneg %p266
        $region50: #{tpu_custom_call.1} parent=11 // pred_check_branch
          %483 = sbr.rel (%p481) target = $region52
        $region51: #{tpu_custom_call.1} parent=11 // pred_region
          _
        $region52: #{tpu_custom_call.1} parent=11 // pred_fallthru
          _
        // Predicated region
        $region53: #{tpu_custom_call.1} parent=11 // pred_check
          %p484 = pneg %p287
        $region54: #{tpu_custom_call.1} parent=11 // pred_check_branch
          %486 = sbr.rel (%p484) target = $region56
        $region55: #{tpu_custom_call.1} parent=11 // pred_region
          _
        $region56: #{tpu_custom_call.1} parent=11 // pred_fallthru
          _
        // Predicated region
        $region57: #{tpu_custom_call.1} parent=11 // pred_check
          %p487 = pneg %p308
        $region58: #{tpu_custom_call.1} parent=11 // pred_check_branch
          %489 = sbr.rel (%p487) target = $region60
        $region59: #{tpu_custom_call.1} parent=11 // pred_region
          _
        $region60: #{tpu_custom_call.1} parent=11 // pred_fallthru
          _
        // Predicated region
        $region61: #{tpu_custom_call.1} parent=11 // pred_check
          %p490 = pneg %p329
        $region62: #{tpu_custom_call.1} parent=11 // pred_check_branch
          %492 = sbr.rel (%p490) target = $region64
        $region63: #{tpu_custom_call.1} parent=11 // pred_region
          _
        $region64: #{tpu_custom_call.1} parent=11 // pred_fallthru
          _
        // Predicated region
        $region65: #{tpu_custom_call.1} parent=11 // pred_check
          %p493 = pneg %p350
        $region66: #{tpu_custom_call.1} parent=11 // pred_check_branch
          %495 = sbr.rel (%p493) target = $region68
        $region67: #{tpu_custom_call.1} parent=11 // pred_region
          _
        $region68: #{tpu_custom_call.1} parent=11 // pred_fallthru
          _
        // Predicated region
        $region69: #{tpu_custom_call.1} parent=11 // pred_check
          %p496 = pneg %p371
        $region70: #{tpu_custom_call.1} parent=11 // pred_check_branch
          %498 = sbr.rel (%p496) target = $region72
        $region71: #{tpu_custom_call.1} parent=11 // pred_region
          _
        $region72: #{tpu_custom_call.1} parent=11 // pred_fallthru
          _
        // Predicated region
        $region73: #{tpu_custom_call.1} parent=11 // pred_check
          %p499 = pneg %p392
        $region74: #{tpu_custom_call.1} parent=11 // pred_check_branch
          %501 = sbr.rel (%p499) target = $region76
        $region75: #{tpu_custom_call.1} parent=11 // pred_region
          _
        $region76: #{tpu_custom_call.1} parent=11 // pred_fallthru
          _
        // Predicated region
        $region77: #{tpu_custom_call.1} parent=11 // pred_check
          %p502 = pneg %p413
        $region78: #{tpu_custom_call.1} parent=11 // pred_check_branch
          %504 = sbr.rel (%p502) target = $region80
        $region79: #{tpu_custom_call.1} parent=11 // pred_region
          _
        $region80: #{tpu_custom_call.1} parent=11 // pred_fallthru
          _
      $region12: #{tpu_custom_call.1} parent=5 // pred_fallthru
        _
      %p505 = scmp.lt.s32.totalorder %s30, 2
      // Predicated region
      $region81: #{tpu_custom_call.1} parent=5 // pred_check
        %p506 = pneg %p505
      $region82: #{tpu_custom_call.1} parent=5 // pred_check_branch
        %508 = sbr.rel (%p506) target = $region84
      $region83: #{tpu_custom_call.1} parent=5 // pred_region
        // Predicated region
        $region85: #{tpu_custom_call.1} parent=83 // pred_check
          %p509 = pneg %p50
        $region86: #{tpu_custom_call.1} parent=83 // pred_check_branch
          %511 = sbr.rel (%p509) target = $region88
        $region87: #{tpu_custom_call.1} parent=83 // pred_region
          %s512 = sand.u32 %s40, 1
          %s513 = scalar_lea.sflag [#allocation3], %s512
          %s514 = sand.u32 %s40, 1
          %s515 = smul.addr %s514, 192
          %s516 = scalar_lea.vmem [#allocation2], %s515
          %s517 = smul.u32 4, %s30
          %519 = vsyncadd %s513, 0
          %s520 = smul.addr %s517, 6
          %s521 = smul.addr %s520, 8
          %s522 = scalar_lea.hbm %s0, %s521
          %s523 = sshll.u32 %s522, 4
          %s524 = int_to_ptr.hbm [resolvable:$true] %s523
          %s525 = sshll.u32 %s516, 4
          %s526 = int_to_ptr.vmem [resolvable:$true] %s525
          %531 = dma.hbm_to_vmem [thread:$0]  %s524, 3072, %s526, %s513, 128, 128, 8
        $region88: #{tpu_custom_call.1} parent=83 // pred_fallthru
          _
      $region84: #{tpu_custom_call.1} parent=5 // pred_fallthru
        _
      %p532 = scmp.le.s32.totalorder 1, %s30
      %p533 = scmp.lt.s32.totalorder %s30, 3
      %p534 = pnand %p532, %p533
      %p535 = pneg %p534
      // Predicated region
      $region89: #{tpu_custom_call.1} parent=5 // pred_check
        _
      $region90: #{tpu_custom_call.1} parent=5 // pred_check_branch
        %537 = sbr.rel (%p534) target = $region92
      $region91: #{tpu_custom_call.1} parent=5 // pred_region
        %s538 = ssub.s32 %s30, 1
        %s539 = sand.u32 %s43, 1
        %s540 = scalar_lea.sflag [#allocation3], %s539
        %s541 = sand.u32 %s43, 1
        %s542 = smul.addr %s541, 192
        %s543 = scalar_lea.vmem [#allocation2], %s542
        // Predicated region
        $region93: #{tpu_custom_call.1} parent=91 // pred_check
          %p544 = pneg %p56
        $region94: #{tpu_custom_call.1} parent=91 // pred_check_branch
          %546 = sbr.rel (%p544) target = $region96
        $region95: #{tpu_custom_call.1} parent=91 // pred_region
          %548 = dma.done %s540, 3072
        $region96: #{tpu_custom_call.1} parent=91 // pred_fallthru
          _
        %s549 = sand.u32 %s43, 1
        %s550 = scalar_lea.sflag [#allocation3], %s549
        %s551 = sand.u32 %s43, 1
        %s552 = smul.addr %s551, 192
        %s553 = scalar_lea.vmem [#allocation2], %s552
        %p554 = pneg %p56
        %p555 = pneg %p53
        %p556 = pneg %p77
        %p557 = pneg %p74
        %p558 = pneg %p98
        %p559 = pneg %p95
        %p560 = pneg %p119
        %p561 = pneg %p116
        %p562 = pneg %p140
        %p563 = pneg %p137
        %p564 = pneg %p161
        %p565 = pneg %p158
        %p566 = pneg %p182
        %p567 = pneg %p179
        %p568 = pneg %p203
        %p569 = pneg %p200
        %p570 = pneg %p224
        %p571 = pneg %p221
        %p572 = pneg %p245
        %p573 = pneg %p242
        %p574 = pneg %p266
        %p575 = pneg %p263
        %p576 = pneg %p287
        %p577 = pneg %p284
        %p578 = pneg %p308
        %p579 = pneg %p305
        %p580 = pneg %p329
        %p581 = pneg %p326
        %p582 = pneg %p350
        %p583 = pneg %p347
        %p584 = pneg %p371
        %p585 = pneg %p368
        %p586 = pneg %p392
        %p587 = pneg %p389
        %p588 = pneg %p413
        %p589 = pneg %p410
        %p590 = pneg %p439
        %p591 = pneg %p436
        %s592 = sand.u32 %s426, 1
        %s593 = scalar_lea.sflag [#allocation4], %s592
        %s594 = sand.u32 %s426, 1
        %s595 = smul.addr %s594, 192
        %s596 = scalar_lea.vmem [#allocation5], %s595
        %s597 = smul.u32 4, %s35
        %s598 = smul.u32 4, %s35
        %v599 = vld [vmem:[%s543] sm:$0xff]
        %v600 = vld [vmem:[%s543 + $0x8] sm:$0xff]
        %v601 = vld [vmem:[%s543 + $0x10] sm:$0xff]
        %v602 = vld [vmem:[%s543 + $0x18] sm:$0xff]
        %v603 = vld [vmem:[%s543 + $0x20] sm:$0xff]
        %v604 = vld [vmem:[%s543 + $0x28] sm:$0xff]
        %v605 = vld [vmem:[%s543 + $0x30] sm:$0xff]
        %v606 = vld [vmem:[%s543 + $0x38] sm:$0xff]
        %v607 = vld [vmem:[%s543 + $0x40] sm:$0xff]
        %v608 = vld [vmem:[%s543 + $0x48] sm:$0xff]
        %v609 = vld [vmem:[%s543 + $0x50] sm:$0xff]
        %v610 = vld [vmem:[%s543 + $0x58] sm:$0xff]
        %v611 = vld [vmem:[%s543 + $0x60] sm:$0xff]
        %v612 = vld [vmem:[%s543 + $0x68] sm:$0xff]
        %v613 = vld [vmem:[%s543 + $0x70] sm:$0xff]
        %v614 = vld [vmem:[%s543 + $0x78] sm:$0xff]
        %v615 = vld [vmem:[%s543 + $0x80] sm:$0xff]
        %v616 = vld [vmem:[%s543 + $0x88] sm:$0xff]
        %v617 = vld [vmem:[%s543 + $0x90] sm:$0xff]
        %v618 = vld [vmem:[%s543 + $0x98] sm:$0xff]
        %v619 = vld [vmem:[%s543 + $0xa0] sm:$0xff]
        %v620 = vld [vmem:[%s543 + $0xa8] sm:$0xff]
        %v621 = vld [vmem:[%s543 + $0xb0] sm:$0xff]
        %v622 = vld [vmem:[%s543 + $0xb8] sm:$0xff]
        %v623 = vld [vmem:[%s12] sm:$0xff]
        %v624 = vld [vmem:[%s12 + $0x8] sm:$0xff]
        %v625 = vld [vmem:[%s12 + $0x10] sm:$0xff]
        %v626 = vld [vmem:[%s12 + $0x18] sm:$0xff]
        %v627 = vld [vmem:[%s12 + $0x20] sm:$0xff]
        %v628 = vld [vmem:[%s12 + $0x28] sm:$0xff]
        %v629 = vld [vmem:[%s12 + $0x30] sm:$0xff]
        %v630 = vld [vmem:[%s12 + $0x38] sm:$0xff]
        %vm631 = vcmask 523264
        %v633 = vsel %vm631, %v599, 0
        %v636 = vsel %vm631, %v600, 0
        %v639 = vsel %vm631, %v601, 0
        %v642 = vsel %vm631, %v602, 0
        %v645 = vsel %vm631, %v603, 0
        %v648 = vsel %vm631, %v604, 0
        %v651 = vsel %vm631, %v605, 0
        %v654 = vsel %vm631, %v606, 0
        %v657 = vsel %vm631, %v607, 0
        %v660 = vsel %vm631, %v608, 0
        %v663 = vsel %vm631, %v609, 0
        %v666 = vsel %vm631, %v610, 0
        %v669 = vsel %vm631, %v611, 0
        %v672 = vsel %vm631, %v612, 0
        %v675 = vsel %vm631, %v613, 0
        %v678 = vsel %vm631, %v614, 0
        %v681 = vsel %vm631, %v615, 0
        %v684 = vsel %vm631, %v616, 0
        %v687 = vsel %vm631, %v617, 0
        %v690 = vsel %vm631, %v618, 0
        %v693 = vsel %vm631, %v619, 0
        %v696 = vsel %vm631, %v620, 0
        %v699 = vsel %vm631, %v621, 0
        %v702 = vsel %vm631, %v622, 0
        %704 = vmatpush.msra.mxu0 0.0
        %705 = vmatpush.msra.mxu0 0.0
        %706 = vmatpush.msra.mxu0 0.0
        %707 = vmatpush.msra.mxu0 0.0
        %708 = vmatpush.msra.mxu0 0.0
        %709 = vmatpush.msra.mxu0 0.0
        %710 = vmatpush.msra.mxu0 0.0
        %711 = vmatpush.msra.mxu0 0.0
        %712 = vmatpush.msra.mxu0 %v630
        %713 = vmatpush.msra.mxu0 %v629
        %714 = vmatpush.msra.mxu0 %v628
        %715 = vmatpush.msra.mxu0 %v627
        %716 = vmatpush.msra.mxu0 %v626
        %717 = vmatpush.msra.mxu0 %v625
        %718 = vmatpush.msra.mxu0 %v624
        %719 = vmatpush.msra.mxu0 %v623
        %720 = vmatmul.f32.gmra.mxu0 %v633
        %v721 = vpop.f32.mrf.mxu0
        %v722 = vadd.f32 0.0, %v721
        %723 = vmatmul.f32.gmra.mxu0 %v636
        %v724 = vpop.f32.mrf.mxu0
        %v725 = vadd.f32 0.0, %v724
        %726 = vmatmul.f32.gmra.mxu0 %v639
        %v727 = vpop.f32.mrf.mxu0
        %v728 = vadd.f32 0.0, %v727
        %729 = vmatmul.f32.gmra.mxu0 %v642
        %v730 = vpop.f32.mrf.mxu0
        %v731 = vadd.f32 0.0, %v730
        %732 = vmatmul.f32.gmra.mxu0 %v645
        %v733 = vpop.f32.mrf.mxu0
        %v734 = vadd.f32 0.0, %v733
        %735 = vmatmul.f32.gmra.mxu0 %v648
        %v736 = vpop.f32.mrf.mxu0
        %v737 = vadd.f32 0.0, %v736
        %738 = vmatmul.f32.gmra.mxu0 %v651
        %v739 = vpop.f32.mrf.mxu0
        %v740 = vadd.f32 0.0, %v739
        %741 = vmatmul.f32.gmra.mxu0 %v654
        %v742 = vpop.f32.mrf.mxu0
        %v743 = vadd.f32 0.0, %v742
        %744 = vmatmul.f32.gmra.mxu0 %v657
        %v745 = vpop.f32.mrf.mxu0
        %v746 = vadd.f32 0.0, %v745
        %747 = vmatmul.f32.gmra.mxu0 %v660
        %v748 = vpop.f32.mrf.mxu0
        %v749 = vadd.f32 0.0, %v748
        %750 = vmatmul.f32.gmra.mxu0 %v663
        %v751 = vpop.f32.mrf.mxu0
        %v752 = vadd.f32 0.0, %v751
        %753 = vmatmul.f32.gmra.mxu0 %v666
        %v754 = vpop.f32.mrf.mxu0
        %v755 = vadd.f32 0.0, %v754
        %756 = vmatmul.f32.gmra.mxu0 %v669
        %v757 = vpop.f32.mrf.mxu0
        %v758 = vadd.f32 0.0, %v757
        %759 = vmatmul.f32.gmra.mxu0 %v672
        %v760 = vpop.f32.mrf.mxu0
        %v761 = vadd.f32 0.0, %v760
        %762 = vmatmul.f32.gmra.mxu0 %v675
        %v763 = vpop.f32.mrf.mxu0
        %v764 = vadd.f32 0.0, %v763
        %765 = vmatmul.f32.gmra.mxu0 %v678
        %v766 = vpop.f32.mrf.mxu0
        %v767 = vadd.f32 0.0, %v766
        %768 = vmatmul.f32.gmra.mxu0 %v681
        %v769 = vpop.f32.mrf.mxu0
        %v770 = vadd.f32 0.0, %v769
        %771 = vmatmul.f32.gmra.mxu0 %v684
        %v772 = vpop.f32.mrf.mxu0
        %v773 = vadd.f32 0.0, %v772
        %774 = vmatmul.f32.gmra.mxu0 %v687
        %v775 = vpop.f32.mrf.mxu0
        %v776 = vadd.f32 0.0, %v775
        %777 = vmatmul.f32.gmra.mxu0 %v690
        %v778 = vpop.f32.mrf.mxu0
        %v779 = vadd.f32 0.0, %v778
        %780 = vmatmul.f32.gmra.mxu0 %v693
        %v781 = vpop.f32.mrf.mxu0
        %v782 = vadd.f32 0.0, %v781
        %783 = vmatmul.f32.gmra.mxu0 %v696
        %v784 = vpop.f32.mrf.mxu0
        %v785 = vadd.f32 0.0, %v784
        %786 = vmatmul.f32.gmra.mxu0 %v699
        %v787 = vpop.f32.mrf.mxu0
        %v788 = vadd.f32 0.0, %v787
        %789 = vmatmul.f32.gmra.mxu0 %v702
        %v790 = vpop.f32.mrf.mxu0
        %v791 = vadd.f32 0.0, %v790
        %792 = vdwg.mxu0
        %v793 = vld [vmem:[%s13] sm:$0xff]
        %v794 = vld [vmem:[%s13 + $0x8] sm:$0xff]
        %v795 = vld [vmem:[%s13 + $0x10] sm:$0xff]
        %v796 = vld [vmem:[%s13 + $0x18] sm:$0xff]
        %v797 = vld [vmem:[%s13 + $0x20] sm:$0xff]
        %v798 = vld [vmem:[%s13 + $0x28] sm:$0xff]
        %v799 = vld [vmem:[%s13 + $0x30] sm:$0xff]
        %v800 = vld [vmem:[%s13 + $0x38] sm:$0xff]
        %801 = vmatpush.msra.mxu0 0.0
        %802 = vmatpush.msra.mxu0 0.0
        %803 = vmatpush.msra.mxu0 0.0
        %804 = vmatpush.msra.mxu0 0.0
        %805 = vmatpush.msra.mxu0 0.0
        %806 = vmatpush.msra.mxu0 0.0
        %807 = vmatpush.msra.mxu0 0.0
        %808 = vmatpush.msra.mxu0 0.0
        %809 = vmatpush.msra.mxu0 %v800
        %810 = vmatpush.msra.mxu0 %v799
        %811 = vmatpush.msra.mxu0 %v798
        %812 = vmatpush.msra.mxu0 %v797
        %813 = vmatpush.msra.mxu0 %v796
        %814 = vmatpush.msra.mxu0 %v795
        %815 = vmatpush.msra.mxu0 %v794
        %816 = vmatpush.msra.mxu0 %v793
        %817 = vmatmul.f32.gmra.mxu0 %v633
        %v818 = vpop.f32.mrf.mxu0
        %v819 = vadd.f32 0.0, %v818
        %820 = vmatmul.f32.gmra.mxu0 %v636
        %v821 = vpop.f32.mrf.mxu0
        %v822 = vadd.f32 0.0, %v821
        %823 = vmatmul.f32.gmra.mxu0 %v639
        %v824 = vpop.f32.mrf.mxu0
        %v825 = vadd.f32 0.0, %v824
        %826 = vmatmul.f32.gmra.mxu0 %v642
        %v827 = vpop.f32.mrf.mxu0
        %v828 = vadd.f32 0.0, %v827
        %829 = vmatmul.f32.gmra.mxu0 %v645
        %v830 = vpop.f32.mrf.mxu0
        %v831 = vadd.f32 0.0, %v830
        %832 = vmatmul.f32.gmra.mxu0 %v648
        %v833 = vpop.f32.mrf.mxu0
        %v834 = vadd.f32 0.0, %v833
        %835 = vmatmul.f32.gmra.mxu0 %v651
        %v836 = vpop.f32.mrf.mxu0
        %v837 = vadd.f32 0.0, %v836
        %838 = vmatmul.f32.gmra.mxu0 %v654
        %v839 = vpop.f32.mrf.mxu0
        %v840 = vadd.f32 0.0, %v839
        %841 = vmatmul.f32.gmra.mxu0 %v657
        %v842 = vpop.f32.mrf.mxu0
        %v843 = vadd.f32 0.0, %v842
        %844 = vmatmul.f32.gmra.mxu0 %v660
        %v845 = vpop.f32.mrf.mxu0
        %v846 = vadd.f32 0.0, %v845
        %847 = vmatmul.f32.gmra.mxu0 %v663
        %v848 = vpop.f32.mrf.mxu0
        %v849 = vadd.f32 0.0, %v848
        %850 = vmatmul.f32.gmra.mxu0 %v666
        %v851 = vpop.f32.mrf.mxu0
        %v852 = vadd.f32 0.0, %v851
        %853 = vmatmul.f32.gmra.mxu0 %v669
        %v854 = vpop.f32.mrf.mxu0
        %v855 = vadd.f32 0.0, %v854
        %856 = vmatmul.f32.gmra.mxu0 %v672
        %v857 = vpop.f32.mrf.mxu0
        %v858 = vadd.f32 0.0, %v857
        %859 = vmatmul.f32.gmra.mxu0 %v675
        %v860 = vpop.f32.mrf.mxu0
        %v861 = vadd.f32 0.0, %v860
        %862 = vmatmul.f32.gmra.mxu0 %v678
        %v863 = vpop.f32.mrf.mxu0
        %v864 = vadd.f32 0.0, %v863
        %865 = vmatmul.f32.gmra.mxu0 %v681
        %v866 = vpop.f32.mrf.mxu0
        %v867 = vadd.f32 0.0, %v866
        %868 = vmatmul.f32.gmra.mxu0 %v684
        %v869 = vpop.f32.mrf.mxu0
        %v870 = vadd.f32 0.0, %v869
        %871 = vmatmul.f32.gmra.mxu0 %v687
        %v872 = vpop.f32.mrf.mxu0
        %v873 = vadd.f32 0.0, %v872
        %874 = vmatmul.f32.gmra.mxu0 %v690
        %v875 = vpop.f32.mrf.mxu0
        %v876 = vadd.f32 0.0, %v875
        %877 = vmatmul.f32.gmra.mxu0 %v693
        %v878 = vpop.f32.mrf.mxu0
        %v879 = vadd.f32 0.0, %v878
        %880 = vmatmul.f32.gmra.mxu0 %v696
        %v881 = vpop.f32.mrf.mxu0
        %v882 = vadd.f32 0.0, %v881
        %883 = vmatmul.f32.gmra.mxu0 %v699
        %v884 = vpop.f32.mrf.mxu0
        %v885 = vadd.f32 0.0, %v884
        %886 = vmatmul.f32.gmra.mxu0 %v702
        %v887 = vpop.f32.mrf.mxu0
        %v888 = vadd.f32 0.0, %v887
        %889 = vdwg.mxu0
        %896 = vrot.lane.b32.xlu0 %v740, 8
        %v897 = vpop.permute.xlu0 %896
        %898 = vrot.lane.b32.xlu0 %v743, 8
        %v899 = vpop.permute.xlu0 %898
        %900 = vrot.lane.b32.xlu0 %v746, 8
        %v901 = vpop.permute.xlu0 %900
        %902 = vrot.lane.b32.xlu0 %v749, 8
        %v903 = vpop.permute.xlu0 %902
        %904 = vrot.lane.b32.xlu0 %v752, 8
        %v905 = vpop.permute.xlu0 %904
        %906 = vrot.lane.b32.xlu0 %v755, 8
        %v907 = vpop.permute.xlu0 %906
        %920 = vrot.lane.b32.xlu0 %v758, 16
        %v921 = vpop.permute.xlu0 %920
        %922 = vrot.lane.b32.xlu0 %v761, 16
        %v923 = vpop.permute.xlu0 %922
        %924 = vrot.lane.b32.xlu0 %v764, 16
        %v925 = vpop.permute.xlu0 %924
        %926 = vrot.lane.b32.xlu0 %v767, 16
        %v927 = vpop.permute.xlu0 %926
        %928 = vrot.lane.b32.xlu0 %v770, 16
        %v929 = vpop.permute.xlu0 %928
        %930 = vrot.lane.b32.xlu0 %v773, 16
        %v931 = vpop.permute.xlu0 %930
        %944 = vrot.lane.b32.xlu0 %v776, 24
        %v945 = vpop.permute.xlu0 %944
        %946 = vrot.lane.b32.xlu0 %v779, 24
        %v947 = vpop.permute.xlu0 %946
        %948 = vrot.lane.b32.xlu0 %v782, 24
        %v949 = vpop.permute.xlu0 %948
        %950 = vrot.lane.b32.xlu0 %v785, 24
        %v951 = vpop.permute.xlu0 %950
        %952 = vrot.lane.b32.xlu0 %v788, 24
        %v953 = vpop.permute.xlu0 %952
        %954 = vrot.lane.b32.xlu0 %v791, 24
        %v955 = vpop.permute.xlu0 %954
        %vm962 = vcmask 64512
        %v963 = vsel %vm962, %v722, %v897
        %v964 = vsel %vm962, %v725, %v899
        %v965 = vsel %vm962, %v728, %v901
        %v966 = vsel %vm962, %v731, %v903
        %v967 = vsel %vm962, %v734, %v905
        %v968 = vsel %vm962, %v737, %v907
        %vm969 = vcmask 130048
        %v970 = vsel %vm969, %v963, %v921
        %v971 = vsel %vm969, %v964, %v923
        %v972 = vsel %vm969, %v965, %v925
        %v973 = vsel %vm969, %v966, %v927
        %v974 = vsel %vm969, %v967, %v929
        %v975 = vsel %vm969, %v968, %v931
        %vm976 = vcmask 195584
        %v977 = vsel %vm976, %v970, %v945
        %v978 = vsel %vm976, %v971, %v947
        %v979 = vsel %vm976, %v972, %v949
        %v980 = vsel %vm976, %v973, %v951
        %v981 = vsel %vm976, %v974, %v953
        %v982 = vsel %vm976, %v975, %v955
        %989 = vrot.lane.b32.xlu0 %v837, 8
        %v990 = vpop.permute.xlu0 %989
        %991 = vrot.lane.b32.xlu0 %v840, 8
        %v992 = vpop.permute.xlu0 %991
        %993 = vrot.lane.b32.xlu0 %v843, 8
        %v994 = vpop.permute.xlu0 %993
        %995 = vrot.lane.b32.xlu0 %v846, 8
        %v996 = vpop.permute.xlu0 %995
        %997 = vrot.lane.b32.xlu0 %v849, 8
        %v998 = vpop.permute.xlu0 %997
        %999 = vrot.lane.b32.xlu0 %v852, 8
        %v1000 = vpop.permute.xlu0 %999
        %1013 = vrot.lane.b32.xlu0 %v855, 16
        %v1014 = vpop.permute.xlu0 %1013
        %1015 = vrot.lane.b32.xlu0 %v858, 16
        %v1016 = vpop.permute.xlu0 %1015
        %1017 = vrot.lane.b32.xlu0 %v861, 16
        %v1018 = vpop.permute.xlu0 %1017
        %1019 = vrot.lane.b32.xlu0 %v864, 16
        %v1020 = vpop.permute.xlu0 %1019
        %1021 = vrot.lane.b32.xlu0 %v867, 16
        %v1022 = vpop.permute.xlu0 %1021
        %1023 = vrot.lane.b32.xlu0 %v870, 16
        %v1024 = vpop.permute.xlu0 %1023
        %1037 = vrot.lane.b32.xlu0 %v873, 24
        %v1038 = vpop.permute.xlu0 %1037
        %1039 = vrot.lane.b32.xlu0 %v876, 24
        %v1040 = vpop.permute.xlu0 %1039
        %1041 = vrot.lane.b32.xlu0 %v879, 24
        %v1042 = vpop.permute.xlu0 %1041
        %1043 = vrot.lane.b32.xlu0 %v882, 24
        %v1044 = vpop.permute.xlu0 %1043
        %1045 = vrot.lane.b32.xlu0 %v885, 24
        %v1046 = vpop.permute.xlu0 %1045
        %1047 = vrot.lane.b32.xlu0 %v888, 24
        %v1048 = vpop.permute.xlu0 %1047
        %v1055 = vsel %vm962, %v819, %v990
        %v1056 = vsel %vm962, %v822, %v992
        %v1057 = vsel %vm962, %v825, %v994
        %v1058 = vsel %vm962, %v828, %v996
        %v1059 = vsel %vm962, %v831, %v998
        %v1060 = vsel %vm962, %v834, %v1000
        %v1061 = vsel %vm969, %v1055, %v1014
        %v1062 = vsel %vm969, %v1056, %v1016
        %v1063 = vsel %vm969, %v1057, %v1018
        %v1064 = vsel %vm969, %v1058, %v1020
        %v1065 = vsel %vm969, %v1059, %v1022
        %v1066 = vsel %vm969, %v1060, %v1024
        %v1067 = vsel %vm976, %v1061, %v1038
        %v1068 = vsel %vm976, %v1062, %v1040
        %v1069 = vsel %vm976, %v1063, %v1042
        %v1070 = vsel %vm976, %v1064, %v1044
        %v1071 = vsel %vm976, %v1065, %v1046
        %v1072 = vsel %vm976, %v1066, %v1048
        %v1073 = vld [vmem:[%s1] sm:$0xff]
        %v1074 = vld [vmem:[%s1 + $0x8] sm:$0xff]
        %v1075 = vld [vmem:[%s1 + $0x10] sm:$0xff]
        %v1076 = vld [vmem:[%s1 + $0x18] sm:$0xff]
        %v1077 = vld [vmem:[%s1 + $0x20] sm:$0xff]
        %v1078 = vld [vmem:[%s1 + $0x28] sm:$0xff]
        %v1079 = vld [vmem:[%s2] sm:$0xff]
        %v1080 = vld [vmem:[%s2 + $0x8] sm:$0xff]
        %v1081 = vld [vmem:[%s2 + $0x10] sm:$0xff]
        %v1082 = vld [vmem:[%s2 + $0x18] sm:$0xff]
        %v1083 = vld [vmem:[%s2 + $0x20] sm:$0xff]
        %v1084 = vld [vmem:[%s2 + $0x28] sm:$0xff]
        %1086 = vset.pattern.permute.xlu0 0
        %1087 = vperm.xlu0 %1086, %v1079
        %v1088 = vpop.permute.xlu0 %1087
        %1091 = vset.pattern.permute.xlu0 0
        %1092 = vperm.xlu0 %1091, %v1080
        %v1093 = vpop.permute.xlu0 %1092
        %1096 = vset.pattern.permute.xlu0 0
        %1097 = vperm.xlu0 %1096, %v1081
        %v1098 = vpop.permute.xlu0 %1097
        %1101 = vset.pattern.permute.xlu0 0
        %1102 = vperm.xlu0 %1101, %v1082
        %v1103 = vpop.permute.xlu0 %1102
        %1106 = vset.pattern.permute.xlu0 0
        %1107 = vperm.xlu0 %1106, %v1083
        %v1108 = vpop.permute.xlu0 %1107
        %1111 = vset.pattern.permute.xlu0 0
        %1112 = vperm.xlu0 %1111, %v1084
        %v1113 = vpop.permute.xlu0 %1112
        %vm1115 = vcmask 392192
        %v1117 = vsel %vm1115, %v1073, 0
        %v1120 = vsel %vm1115, %v1074, 0
        %v1123 = vsel %vm1115, %v1075, 0
        %v1126 = vsel %vm1115, %v1076, 0
        %v1129 = vsel %vm1115, %v1077, 0
        %v1132 = vsel %vm1115, %v1078, 0
        %1134 = vmatpush.msra.mxu0 0.0
        %1135 = vmatpush.msra.mxu0 0.0
        %1136 = vmatpush.msra.mxu0 0.0
        %1137 = vmatpush.msra.mxu0 0.0
        %1138 = vmatpush.msra.mxu0 0.0
        %1139 = vmatpush.msra.mxu0 0.0
        %1140 = vmatpush.msra.mxu0 0.0
        %1141 = vmatpush.msra.mxu0 0.0
        %1142 = vmatpush.msra.mxu0 0.0
        %1143 = vmatpush.msra.mxu0 0.0
        %1144 = vmatpush.msra.mxu0 %v982
        %1145 = vmatpush.msra.mxu0 %v981
        %1146 = vmatpush.msra.mxu0 %v980
        %1147 = vmatpush.msra.mxu0 %v979
        %1148 = vmatpush.msra.mxu0 %v978
        %1149 = vmatpush.msra.mxu0 %v977
        %1150 = vmatmul.f32.gmra.mxu0 %v1117
        %v1151 = vpop.f32.mrf.mxu0
        %v1152 = vadd.f32 %v1088, %v1151
        %1153 = vmatmul.f32.gmra.mxu0 %v1120
        %v1154 = vpop.f32.mrf.mxu0
        %v1155 = vadd.f32 %v1093, %v1154
        %1156 = vmatmul.f32.gmra.mxu0 %v1123
        %v1157 = vpop.f32.mrf.mxu0
        %v1158 = vadd.f32 %v1098, %v1157
        %1159 = vmatmul.f32.gmra.mxu0 %v1126
        %v1160 = vpop.f32.mrf.mxu0
        %v1161 = vadd.f32 %v1103, %v1160
        %1162 = vmatmul.f32.gmra.mxu0 %v1129
        %v1163 = vpop.f32.mrf.mxu0
        %v1164 = vadd.f32 %v1108, %v1163
        %1165 = vmatmul.f32.gmra.mxu0 %v1132
        %v1166 = vpop.f32.mrf.mxu0
        %v1167 = vadd.f32 %v1113, %v1166
        %1168 = vdwg.mxu0
        %v1169 = vmax.f32 %v1152, 0.0
        %v1170 = vmax.f32 %v1155, 0.0
        %v1171 = vmax.f32 %v1158, 0.0
        %v1172 = vmax.f32 %v1161, 0.0
        %v1173 = vmax.f32 %v1164, 0.0
        %v1174 = vmax.f32 %v1167, 0.0
        %1175 = vmatpush.msra.mxu0 0.0
        %1176 = vmatpush.msra.mxu0 0.0
        %1177 = vmatpush.msra.mxu0 0.0
        %1178 = vmatpush.msra.mxu0 0.0
        %1179 = vmatpush.msra.mxu0 0.0
        %1180 = vmatpush.msra.mxu0 0.0
        %1181 = vmatpush.msra.mxu0 0.0
        %1182 = vmatpush.msra.mxu0 0.0
        %1183 = vmatpush.msra.mxu0 0.0
        %1184 = vmatpush.msra.mxu0 0.0
        %1185 = vmatpush.msra.mxu0 %v1072
        %1186 = vmatpush.msra.mxu0 %v1071
        %1187 = vmatpush.msra.mxu0 %v1070
        %1188 = vmatpush.msra.mxu0 %v1069
        %1189 = vmatpush.msra.mxu0 %v1068
        %1190 = vmatpush.msra.mxu0 %v1067
        %1191 = vmatmul.f32.gmra.mxu0 %v1117
        %v1192 = vpop.f32.mrf.mxu0
        %v1193 = vadd.f32 %v1088, %v1192
        %1194 = vmatmul.f32.gmra.mxu0 %v1120
        %v1195 = vpop.f32.mrf.mxu0
        %v1196 = vadd.f32 %v1093, %v1195
        %1197 = vmatmul.f32.gmra.mxu0 %v1123
        %v1198 = vpop.f32.mrf.mxu0
        %v1199 = vadd.f32 %v1098, %v1198
        %1200 = vmatmul.f32.gmra.mxu0 %v1126
        %v1201 = vpop.f32.mrf.mxu0
        %v1202 = vadd.f32 %v1103, %v1201
        %1203 = vmatmul.f32.gmra.mxu0 %v1129
        %v1204 = vpop.f32.mrf.mxu0
        %v1205 = vadd.f32 %v1108, %v1204
        %1206 = vmatmul.f32.gmra.mxu0 %v1132
        %v1207 = vpop.f32.mrf.mxu0
        %v1208 = vadd.f32 %v1113, %v1207
        %1209 = vdwg.mxu0
        %v1210 = vmax.f32 %v1193, 0.0
        %v1211 = vmax.f32 %v1196, 0.0
        %v1212 = vmax.f32 %v1199, 0.0
        %v1213 = vmax.f32 %v1202, 0.0
        %v1214 = vmax.f32 %v1205, 0.0
        %v1215 = vmax.f32 %v1208, 0.0
        %v1216 = vld [vmem:[%s3] sm:$0xff]
        %v1217 = vld [vmem:[%s3 + $0x8] sm:$0xff]
        %v1218 = vld [vmem:[%s3 + $0x10] sm:$0xff]
        %v1219 = vld [vmem:[%s3 + $0x18] sm:$0xff]
        %v1220 = vld [vmem:[%s3 + $0x20] sm:$0xff]
        %v1221 = vld [vmem:[%s3 + $0x28] sm:$0xff]
        %v1222 = vld [vmem:[%s4] sm:$0xff]
        %v1223 = vld [vmem:[%s4 + $0x8] sm:$0xff]
        %v1224 = vld [vmem:[%s4 + $0x10] sm:$0xff]
        %v1225 = vld [vmem:[%s4 + $0x18] sm:$0xff]
        %v1226 = vld [vmem:[%s4 + $0x20] sm:$0xff]
        %v1227 = vld [vmem:[%s4 + $0x28] sm:$0xff]
        %1229 = vset.pattern.permute.xlu0 0
        %1230 = vperm.xlu0 %1229, %v1222
        %v1231 = vpop.permute.xlu0 %1230
        %1234 = vset.pattern.permute.xlu0 0
        %1235 = vperm.xlu0 %1234, %v1223
        %v1236 = vpop.permute.xlu0 %1235
        %1239 = vset.pattern.permute.xlu0 0
        %1240 = vperm.xlu0 %1239, %v1224
        %v1241 = vpop.permute.xlu0 %1240
        %1244 = vset.pattern.permute.xlu0 0
        %1245 = vperm.xlu0 %1244, %v1225
        %v1246 = vpop.permute.xlu0 %1245
        %1249 = vset.pattern.permute.xlu0 0
        %1250 = vperm.xlu0 %1249, %v1226
        %v1251 = vpop.permute.xlu0 %1250
        %1254 = vset.pattern.permute.xlu0 0
        %1255 = vperm.xlu0 %1254, %v1227
        %v1256 = vpop.permute.xlu0 %1255
        %v1259 = vsel %vm1115, %v1216, 0
        %v1262 = vsel %vm1115, %v1217, 0
        %v1265 = vsel %vm1115, %v1218, 0
        %v1268 = vsel %vm1115, %v1219, 0
        %v1271 = vsel %vm1115, %v1220, 0
        %v1274 = vsel %vm1115, %v1221, 0
        %1276 = vmatpush.msra.mxu0 0.0
        %1277 = vmatpush.msra.mxu0 0.0
        %1278 = vmatpush.msra.mxu0 0.0
        %1279 = vmatpush.msra.mxu0 0.0
        %1280 = vmatpush.msra.mxu0 0.0
        %1281 = vmatpush.msra.mxu0 0.0
        %1282 = vmatpush.msra.mxu0 0.0
        %1283 = vmatpush.msra.mxu0 0.0
        %1284 = vmatpush.msra.mxu0 0.0
        %1285 = vmatpush.msra.mxu0 0.0
        %1286 = vmatpush.msra.mxu0 %v1174
        %1287 = vmatpush.msra.mxu0 %v1173
        %1288 = vmatpush.msra.mxu0 %v1172
        %1289 = vmatpush.msra.mxu0 %v1171
        %1290 = vmatpush.msra.mxu0 %v1170
        %1291 = vmatpush.msra.mxu0 %v1169
        %1292 = vmatmul.f32.gmra.mxu0 %v1259
        %v1293 = vpop.f32.mrf.mxu0
        %v1294 = vadd.f32 %v1231, %v1293
        %1295 = vmatmul.f32.gmra.mxu0 %v1262
        %v1296 = vpop.f32.mrf.mxu0
        %v1297 = vadd.f32 %v1236, %v1296
        %1298 = vmatmul.f32.gmra.mxu0 %v1265
        %v1299 = vpop.f32.mrf.mxu0
        %v1300 = vadd.f32 %v1241, %v1299
        %1301 = vmatmul.f32.gmra.mxu0 %v1268
        %v1302 = vpop.f32.mrf.mxu0
        %v1303 = vadd.f32 %v1246, %v1302
        %1304 = vmatmul.f32.gmra.mxu0 %v1271
        %v1305 = vpop.f32.mrf.mxu0
        %v1306 = vadd.f32 %v1251, %v1305
        %1307 = vmatmul.f32.gmra.mxu0 %v1274
        %v1308 = vpop.f32.mrf.mxu0
        %v1309 = vadd.f32 %v1256, %v1308
        %1310 = vdwg.mxu0
        %v1311 = vmax.f32 %v1294, 0.0
        %v1312 = vmax.f32 %v1297, 0.0
        %v1313 = vmax.f32 %v1300, 0.0
        %v1314 = vmax.f32 %v1303, 0.0
        %v1315 = vmax.f32 %v1306, 0.0
        %v1316 = vmax.f32 %v1309, 0.0
        %v1317 = vld [vmem:[%s5] sm:$0xff]
        %v1318 = vld [vmem:[%s5 + $0x8] sm:$0xff]
        %v1319 = vld [vmem:[%s5 + $0x10] sm:$0xff]
        %v1320 = vld [vmem:[%s5 + $0x18] sm:$0xff]
        %v1321 = vld [vmem:[%s5 + $0x20] sm:$0xff]
        %v1322 = vld [vmem:[%s5 + $0x28] sm:$0xff]
        %v1323 = vld [vmem:[%s6] sm:$0xff]
        %v1324 = vld [vmem:[%s6 + $0x8] sm:$0xff]
        %v1325 = vld [vmem:[%s6 + $0x10] sm:$0xff]
        %v1326 = vld [vmem:[%s6 + $0x18] sm:$0xff]
        %v1327 = vld [vmem:[%s6 + $0x20] sm:$0xff]
        %v1328 = vld [vmem:[%s6 + $0x28] sm:$0xff]
        %1330 = vset.pattern.permute.xlu0 0
        %1331 = vperm.xlu0 %1330, %v1323
        %v1332 = vpop.permute.xlu0 %1331
        %1335 = vset.pattern.permute.xlu0 0
        %1336 = vperm.xlu0 %1335, %v1324
        %v1337 = vpop.permute.xlu0 %1336
        %1340 = vset.pattern.permute.xlu0 0
        %1341 = vperm.xlu0 %1340, %v1325
        %v1342 = vpop.permute.xlu0 %1341
        %1345 = vset.pattern.permute.xlu0 0
        %1346 = vperm.xlu0 %1345, %v1326
        %v1347 = vpop.permute.xlu0 %1346
        %1350 = vset.pattern.permute.xlu0 0
        %1351 = vperm.xlu0 %1350, %v1327
        %v1352 = vpop.permute.xlu0 %1351
        %1355 = vset.pattern.permute.xlu0 0
        %1356 = vperm.xlu0 %1355, %v1328
        %v1357 = vpop.permute.xlu0 %1356
        %v1360 = vsel %vm1115, %v1317, 0
        %v1363 = vsel %vm1115, %v1318, 0
        %v1366 = vsel %vm1115, %v1319, 0
        %v1369 = vsel %vm1115, %v1320, 0
        %v1372 = vsel %vm1115, %v1321, 0
        %v1375 = vsel %vm1115, %v1322, 0
        %1377 = vmatpush.msra.mxu0 0.0
        %1378 = vmatpush.msra.mxu0 0.0
        %1379 = vmatpush.msra.mxu0 0.0
        %1380 = vmatpush.msra.mxu0 0.0
        %1381 = vmatpush.msra.mxu0 0.0
        %1382 = vmatpush.msra.mxu0 0.0
        %1383 = vmatpush.msra.mxu0 0.0
        %1384 = vmatpush.msra.mxu0 0.0
        %1385 = vmatpush.msra.mxu0 0.0
        %1386 = vmatpush.msra.mxu0 0.0
        %1387 = vmatpush.msra.mxu0 %v1215
        %1388 = vmatpush.msra.mxu0 %v1214
        %1389 = vmatpush.msra.mxu0 %v1213
        %1390 = vmatpush.msra.mxu0 %v1212
        %1391 = vmatpush.msra.mxu0 %v1211
        %1392 = vmatpush.msra.mxu0 %v1210
        %1393 = vmatmul.f32.gmra.mxu0 %v1360
        %v1394 = vpop.f32.mrf.mxu0
        %v1395 = vadd.f32 %v1332, %v1394
        %1396 = vmatmul.f32.gmra.mxu0 %v1363
        %v1397 = vpop.f32.mrf.mxu0
        %v1398 = vadd.f32 %v1337, %v1397
        %1399 = vmatmul.f32.gmra.mxu0 %v1366
        %v1400 = vpop.f32.mrf.mxu0
        %v1401 = vadd.f32 %v1342, %v1400
        %1402 = vmatmul.f32.gmra.mxu0 %v1369
        %v1403 = vpop.f32.mrf.mxu0
        %v1404 = vadd.f32 %v1347, %v1403
        %1405 = vmatmul.f32.gmra.mxu0 %v1372
        %v1406 = vpop.f32.mrf.mxu0
        %v1407 = vadd.f32 %v1352, %v1406
        %1408 = vmatmul.f32.gmra.mxu0 %v1375
        %v1409 = vpop.f32.mrf.mxu0
        %v1410 = vadd.f32 %v1357, %v1409
        %1411 = vdwg.mxu0
        %v1412 = vmax.f32 %v1395, 0.0
        %v1413 = vmax.f32 %v1398, 0.0
        %v1414 = vmax.f32 %v1401, 0.0
        %v1415 = vmax.f32 %v1404, 0.0
        %v1416 = vmax.f32 %v1407, 0.0
        %v1417 = vmax.f32 %v1410, 0.0
        %v1418 = vld [vmem:[%s16] sm:$0xff]
        %v1419 = vld [vmem:[%s16 + $0x8] sm:$0xff]
        %v1420 = vld [vmem:[%s16 + $0x10] sm:$0xff]
        %v1421 = vld [vmem:[%s16 + $0x18] sm:$0xff]
        %v1422 = vld [vmem:[%s17] sm:$0xff]
        %v1423 = vld [vmem:[%s17 + $0x8] sm:$0xff]
        %v1424 = vld [vmem:[%s17 + $0x10] sm:$0xff]
        %v1425 = vld [vmem:[%s17 + $0x18] sm:$0xff]
        %vm1426 = vcmask 261120
        %v1428 = vsel %vm1426, %v1210, 0
        %v1431 = vsel %vm1426, %v1211, 0
        %v1434 = vsel %vm1426, %v1212, 0
        %v1437 = vsel %vm1426, %v1213, 0
        %v1440 = vsel %vm1426, %v1214, 0
        %v1443 = vsel %vm1426, %v1215, 0
        %1445 = vmatpush.msra.mxu0 0.0
        %1446 = vmatpush.msra.mxu0 0.0
        %1447 = vmatpush.msra.mxu0 0.0
        %1448 = vmatpush.msra.mxu0 0.0
        %1449 = vmatpush.msra.mxu0 0.0
        %1450 = vmatpush.msra.mxu0 0.0
        %1451 = vmatpush.msra.mxu0 0.0
        %1452 = vmatpush.msra.mxu0 0.0
        %1453 = vmatpush.msra.mxu0 0.0
        %1454 = vmatpush.msra.mxu0 0.0
        %1455 = vmatpush.msra.mxu0 0.0
        %1456 = vmatpush.msra.mxu0 0.0
        %1457 = vmatpush.msra.mxu0 %v1425
        %1458 = vmatpush.msra.mxu0 %v1424
        %1459 = vmatpush.msra.mxu0 %v1423
        %1460 = vmatpush.msra.mxu0 %v1422
        %1461 = vmatmul.f32.gmra.mxu0 %v1428
        %v1462 = vpop.f32.mrf.mxu0
        %v1463 = vadd.f32 0.0, %v1462
        %1464 = vmatmul.f32.gmra.mxu0 %v1431
        %v1465 = vpop.f32.mrf.mxu0
        %v1466 = vadd.f32 0.0, %v1465
        %1467 = vmatmul.f32.gmra.mxu0 %v1434
        %v1468 = vpop.f32.mrf.mxu0
        %v1469 = vadd.f32 0.0, %v1468
        %1470 = vmatmul.f32.gmra.mxu0 %v1437
        %v1471 = vpop.f32.mrf.mxu0
        %v1472 = vadd.f32 0.0, %v1471
        %1473 = vmatmul.f32.gmra.mxu0 %v1440
        %v1474 = vpop.f32.mrf.mxu0
        %v1475 = vadd.f32 0.0, %v1474
        %1476 = vmatmul.f32.gmra.mxu0 %v1443
        %v1477 = vpop.f32.mrf.mxu0
        %v1478 = vadd.f32 0.0, %v1477
        %1479 = vdwg.mxu0
        %v1481 = vsel %vm1426, %v1169, 0
        %v1484 = vsel %vm1426, %v1170, 0
        %v1487 = vsel %vm1426, %v1171, 0
        %v1490 = vsel %vm1426, %v1172, 0
        %v1493 = vsel %vm1426, %v1173, 0
        %v1496 = vsel %vm1426, %v1174, 0
        %1498 = vmatpush.msra.mxu0 0.0
        %1499 = vmatpush.msra.mxu0 0.0
        %1500 = vmatpush.msra.mxu0 0.0
        %1501 = vmatpush.msra.mxu0 0.0
        %1502 = vmatpush.msra.mxu0 0.0
        %1503 = vmatpush.msra.mxu0 0.0
        %1504 = vmatpush.msra.mxu0 0.0
        %1505 = vmatpush.msra.mxu0 0.0
        %1506 = vmatpush.msra.mxu0 0.0
        %1507 = vmatpush.msra.mxu0 0.0
        %1508 = vmatpush.msra.mxu0 0.0
        %1509 = vmatpush.msra.mxu0 0.0
        %1510 = vmatpush.msra.mxu0 %v1421
        %1511 = vmatpush.msra.mxu0 %v1420
        %1512 = vmatpush.msra.mxu0 %v1419
        %1513 = vmatpush.msra.mxu0 %v1418
        %1514 = vmatmul.f32.gmra.mxu0 %v1481
        %v1515 = vpop.f32.mrf.mxu0
        %v1516 = vadd.f32 %v1463, %v1515
        %1517 = vmatmul.f32.gmra.mxu0 %v1484
        %v1518 = vpop.f32.mrf.mxu0
        %v1519 = vadd.f32 %v1466, %v1518
        %1520 = vmatmul.f32.gmra.mxu0 %v1487
        %v1521 = vpop.f32.mrf.mxu0
        %v1522 = vadd.f32 %v1469, %v1521
        %1523 = vmatmul.f32.gmra.mxu0 %v1490
        %v1524 = vpop.f32.mrf.mxu0
        %v1525 = vadd.f32 %v1472, %v1524
        %1526 = vmatmul.f32.gmra.mxu0 %v1493
        %v1527 = vpop.f32.mrf.mxu0
        %v1528 = vadd.f32 %v1475, %v1527
        %1529 = vmatmul.f32.gmra.mxu0 %v1496
        %v1530 = vpop.f32.mrf.mxu0
        %v1531 = vadd.f32 %v1478, %v1530
        %1532 = vdwg.mxu0
        %v1533 = vmul.f32 %v1516, 0.0625
        %v1534 = vmul.f32 %v1519, 0.0625
        %v1535 = vmul.f32 %v1522, 0.0625
        %v1536 = vmul.f32 %v1525, 0.0625
        %v1537 = vmul.f32 %v1528, 0.0625
        %v1538 = vmul.f32 %v1531, 0.0625
        %v1539 = vld [vmem:[%s7] sm:$0xff]
        %v1540 = vld [vmem:[%s7 + $0x8] sm:$0xff]
        %v1541 = vld [vmem:[%s7 + $0x10] sm:$0xff]
        %v1542 = vld [vmem:[%s7 + $0x18] sm:$0xff]
        %v1543 = vld [vmem:[%s7 + $0x20] sm:$0xff]
        %v1544 = vld [vmem:[%s7 + $0x28] sm:$0xff]
        %1546 = vset.pattern.permute.xlu0 0
        %1547 = vperm.xlu0 %1546, %v1539
        %v1548 = vpop.permute.xlu0 %1547
        %1551 = vset.pattern.permute.xlu0 0
        %1552 = vperm.xlu0 %1551, %v1540
        %v1553 = vpop.permute.xlu0 %1552
        %1556 = vset.pattern.permute.xlu0 0
        %1557 = vperm.xlu0 %1556, %v1541
        %v1558 = vpop.permute.xlu0 %1557
        %1561 = vset.pattern.permute.xlu0 0
        %1562 = vperm.xlu0 %1561, %v1542
        %v1563 = vpop.permute.xlu0 %1562
        %1566 = vset.pattern.permute.xlu0 0
        %1567 = vperm.xlu0 %1566, %v1543
        %v1568 = vpop.permute.xlu0 %1567
        %1571 = vset.pattern.permute.xlu0 0
        %1572 = vperm.xlu0 %1571, %v1544
        %v1573 = vpop.permute.xlu0 %1572
        %v1575 = vmul.f32 %v1533, %v1548
        %v1576 = vmul.f32 %v1534, %v1553
        %v1577 = vmul.f32 %v1535, %v1558
        %v1578 = vmul.f32 %v1536, %v1563
        %v1579 = vmul.f32 %v1537, %v1568
        %v1580 = vmul.f32 %v1538, %v1573
        %v1581 = vld [vmem:[%s8] sm:$0x7]
        %v1582 = vld [vmem:[%s9] sm:$0x7]
        %1584 = vset.pattern.permute.xlu0 0
        %1585 = vperm.xlu0 %1584, %v1582
        %v1586 = vpop.permute.xlu0 %1585
        %v1589 = vsel %vm1115, %v1581, 0
        %1591 = vmatpush.msra.mxu0 0.0
        %1592 = vmatpush.msra.mxu0 0.0
        %1593 = vmatpush.msra.mxu0 0.0
        %1594 = vmatpush.msra.mxu0 0.0
        %1595 = vmatpush.msra.mxu0 0.0
        %1596 = vmatpush.msra.mxu0 0.0
        %1597 = vmatpush.msra.mxu0 0.0
        %1598 = vmatpush.msra.mxu0 0.0
        %1599 = vmatpush.msra.mxu0 0.0
        %1600 = vmatpush.msra.mxu0 0.0
        %1601 = vmatpush.msra.mxu0 %v1580
        %1602 = vmatpush.msra.mxu0 %v1579
        %1603 = vmatpush.msra.mxu0 %v1578
        %1604 = vmatpush.msra.mxu0 %v1577
        %1605 = vmatpush.msra.mxu0 %v1576
        %1606 = vmatpush.msra.mxu0 %v1575
        %1607 = vmatmul.f32.gmra.mxu0 %v1589
        %v1608 = vpop.f32.mrf.mxu0
        %v1609 = vadd.f32 %v1586, %v1608
        %1610 = vdwg.mxu0
        %v1611 = vmax.f32 %v1609, 0.0
        %v1612 = vld [vmem:[%s10] sm:$0xff]
        %v1613 = vld [vmem:[%s10 + $0x8] sm:$0xff]
        %v1614 = vld [vmem:[%s10 + $0x10] sm:$0xff]
        %v1615 = vld [vmem:[%s10 + $0x18] sm:$0xff]
        %v1616 = vld [vmem:[%s10 + $0x20] sm:$0xff]
        %v1617 = vld [vmem:[%s10 + $0x28] sm:$0xff]
        %v1618 = vld [vmem:[%s11] sm:$0xff]
        %v1619 = vld [vmem:[%s11 + $0x8] sm:$0xff]
        %v1620 = vld [vmem:[%s11 + $0x10] sm:$0xff]
        %v1621 = vld [vmem:[%s11 + $0x18] sm:$0xff]
        %v1622 = vld [vmem:[%s11 + $0x20] sm:$0xff]
        %v1623 = vld [vmem:[%s11 + $0x28] sm:$0xff]
        %1625 = vset.pattern.permute.xlu0 0
        %1626 = vperm.xlu0 %1625, %v1618
        %v1627 = vpop.permute.xlu0 %1626
        %1630 = vset.pattern.permute.xlu0 0
        %1631 = vperm.xlu0 %1630, %v1619
        %v1632 = vpop.permute.xlu0 %1631
        %1635 = vset.pattern.permute.xlu0 0
        %1636 = vperm.xlu0 %1635, %v1620
        %v1637 = vpop.permute.xlu0 %1636
        %1640 = vset.pattern.permute.xlu0 0
        %1641 = vperm.xlu0 %1640, %v1621
        %v1642 = vpop.permute.xlu0 %1641
        %1645 = vset.pattern.permute.xlu0 0
        %1646 = vperm.xlu0 %1645, %v1622
        %v1647 = vpop.permute.xlu0 %1646
        %1650 = vset.pattern.permute.xlu0 0
        %1651 = vperm.xlu0 %1650, %v1623
        %v1652 = vpop.permute.xlu0 %1651
        %vm1654 = vcmask 23552
        %v1656 = vsel %vm1654, %v1612, 0
        %v1659 = vsel %vm1654, %v1613, 0
        %v1662 = vsel %vm1654, %v1614, 0
        %v1665 = vsel %vm1654, %v1615, 0
        %v1668 = vsel %vm1654, %v1616, 0
        %v1671 = vsel %vm1654, %v1617, 0
        %vm1673 = vcmask 1042432
        %v1675 = vsel %vm1673, %v1611, 0
        %1677 = vmatpush.msra.mxu0 0.0
        %1678 = vmatpush.msra.mxu0 0.0
        %1679 = vmatpush.msra.mxu0 0.0
        %1680 = vmatpush.msra.mxu0 0.0
        %1681 = vmatpush.msra.mxu0 0.0
        %1682 = vmatpush.msra.mxu0 0.0
        %1683 = vmatpush.msra.mxu0 0.0
        %1684 = vmatpush.msra.mxu0 0.0
        %1685 = vmatpush.msra.mxu0 0.0
        %1686 = vmatpush.msra.mxu0 0.0
        %1687 = vmatpush.msra.mxu0 0.0
        %1688 = vmatpush.msra.mxu0 0.0
        %1689 = vmatpush.msra.mxu0 0.0
        %1690 = vmatpush.msra.mxu0 0.0
        %1691 = vmatpush.msra.mxu0 0.0
        %1692 = vmatpush.msra.mxu0 %v1675
        %1693 = vmatmul.f32.gmra.mxu0 %v1656
        %v1694 = vpop.f32.mrf.mxu0
        %v1695 = vadd.f32 %v1627, %v1694
        %1696 = vmatmul.f32.gmra.mxu0 %v1659
        %v1697 = vpop.f32.mrf.mxu0
        %v1698 = vadd.f32 %v1632, %v1697
        %1699 = vmatmul.f32.gmra.mxu0 %v1662
        %v1700 = vpop.f32.mrf.mxu0
        %v1701 = vadd.f32 %v1637, %v1700
        %1702 = vmatmul.f32.gmra.mxu0 %v1665
        %v1703 = vpop.f32.mrf.mxu0
        %v1704 = vadd.f32 %v1642, %v1703
        %1705 = vmatmul.f32.gmra.mxu0 %v1668
        %v1706 = vpop.f32.mrf.mxu0
        %v1707 = vadd.f32 %v1647, %v1706
        %1708 = vmatmul.f32.gmra.mxu0 %v1671
        %v1709 = vpop.f32.mrf.mxu0
        %v1710 = vadd.f32 %v1652, %v1709
        %1711 = vdwg.mxu0
        %1718 = vrot.lane.b32.xlu0 %v1311, 120
        %v1719 = vpop.permute.xlu0 %1718
        %1720 = vrot.lane.b32.xlu0 %v1312, 120
        %v1721 = vpop.permute.xlu0 %1720
        %1722 = vrot.lane.b32.xlu0 %v1313, 120
        %v1723 = vpop.permute.xlu0 %1722
        %1724 = vrot.lane.b32.xlu0 %v1314, 120
        %v1725 = vpop.permute.xlu0 %1724
        %1726 = vrot.lane.b32.xlu0 %v1315, 120
        %v1727 = vpop.permute.xlu0 %1726
        %1728 = vrot.lane.b32.xlu0 %v1316, 120
        %v1729 = vpop.permute.xlu0 %1728
        %1730 = vrot.lane.b32.xlu0 %v1311, 112
        %v1731 = vpop.permute.xlu0 %1730
        %1732 = vrot.lane.b32.xlu0 %v1312, 112
        %v1733 = vpop.permute.xlu0 %1732
        %1734 = vrot.lane.b32.xlu0 %v1313, 112
        %v1735 = vpop.permute.xlu0 %1734
        %1736 = vrot.lane.b32.xlu0 %v1314, 112
        %v1737 = vpop.permute.xlu0 %1736
        %1738 = vrot.lane.b32.xlu0 %v1315, 112
        %v1739 = vpop.permute.xlu0 %1738
        %1740 = vrot.lane.b32.xlu0 %v1316, 112
        %v1741 = vpop.permute.xlu0 %1740
        %1742 = vrot.lane.b32.xlu0 %v1311, 104
        %v1743 = vpop.permute.xlu0 %1742
        %1744 = vrot.lane.b32.xlu0 %v1312, 104
        %v1745 = vpop.permute.xlu0 %1744
        %1746 = vrot.lane.b32.xlu0 %v1313, 104
        %v1747 = vpop.permute.xlu0 %1746
        %1748 = vrot.lane.b32.xlu0 %v1314, 104
        %v1749 = vpop.permute.xlu0 %1748
        %1750 = vrot.lane.b32.xlu0 %v1315, 104
        %v1751 = vpop.permute.xlu0 %1750
        %1752 = vrot.lane.b32.xlu0 %v1316, 104
        %v1753 = vpop.permute.xlu0 %1752
        %1760 = vrot.lane.b32.xlu0 %v1412, 120
        %v1761 = vpop.permute.xlu0 %1760
        %1762 = vrot.lane.b32.xlu0 %v1413, 120
        %v1763 = vpop.permute.xlu0 %1762
        %1764 = vrot.lane.b32.xlu0 %v1414, 120
        %v1765 = vpop.permute.xlu0 %1764
        %1766 = vrot.lane.b32.xlu0 %v1415, 120
        %v1767 = vpop.permute.xlu0 %1766
        %1768 = vrot.lane.b32.xlu0 %v1416, 120
        %v1769 = vpop.permute.xlu0 %1768
        %1770 = vrot.lane.b32.xlu0 %v1417, 120
        %v1771 = vpop.permute.xlu0 %1770
        %1772 = vrot.lane.b32.xlu0 %v1412, 112
        %v1773 = vpop.permute.xlu0 %1772
        %1774 = vrot.lane.b32.xlu0 %v1413, 112
        %v1775 = vpop.permute.xlu0 %1774
        %1776 = vrot.lane.b32.xlu0 %v1414, 112
        %v1777 = vpop.permute.xlu0 %1776
        %1778 = vrot.lane.b32.xlu0 %v1415, 112
        %v1779 = vpop.permute.xlu0 %1778
        %1780 = vrot.lane.b32.xlu0 %v1416, 112
        %v1781 = vpop.permute.xlu0 %1780
        %1782 = vrot.lane.b32.xlu0 %v1417, 112
        %v1783 = vpop.permute.xlu0 %1782
        %1784 = vrot.lane.b32.xlu0 %v1412, 104
        %v1785 = vpop.permute.xlu0 %1784
        %1786 = vrot.lane.b32.xlu0 %v1413, 104
        %v1787 = vpop.permute.xlu0 %1786
        %1788 = vrot.lane.b32.xlu0 %v1414, 104
        %v1789 = vpop.permute.xlu0 %1788
        %1790 = vrot.lane.b32.xlu0 %v1415, 104
        %v1791 = vpop.permute.xlu0 %1790
        %1792 = vrot.lane.b32.xlu0 %v1416, 104
        %v1793 = vpop.permute.xlu0 %1792
        %1794 = vrot.lane.b32.xlu0 %v1417, 104
        %v1795 = vpop.permute.xlu0 %1794
        %1802 = vrot.lane.b32.xlu0 %v1695, 127
        %v1803 = vpop.permute.xlu0 %1802
        %1804 = vrot.lane.b32.xlu0 %v1698, 127
        %v1805 = vpop.permute.xlu0 %1804
        %1806 = vrot.lane.b32.xlu0 %v1701, 127
        %v1807 = vpop.permute.xlu0 %1806
        %1808 = vrot.lane.b32.xlu0 %v1704, 127
        %v1809 = vpop.permute.xlu0 %1808
        %1810 = vrot.lane.b32.xlu0 %v1707, 127
        %v1811 = vpop.permute.xlu0 %1810
        %1812 = vrot.lane.b32.xlu0 %v1710, 127
        %v1813 = vpop.permute.xlu0 %1812
        %1814 = vrot.lane.b32.xlu0 %v1695, 126
        %v1815 = vpop.permute.xlu0 %1814
        %1816 = vrot.lane.b32.xlu0 %v1698, 126
        %v1817 = vpop.permute.xlu0 %1816
        %1818 = vrot.lane.b32.xlu0 %v1701, 126
        %v1819 = vpop.permute.xlu0 %1818
        %1820 = vrot.lane.b32.xlu0 %v1704, 126
        %v1821 = vpop.permute.xlu0 %1820
        %1822 = vrot.lane.b32.xlu0 %v1707, 126
        %v1823 = vpop.permute.xlu0 %1822
        %1824 = vrot.lane.b32.xlu0 %v1710, 126
        %v1825 = vpop.permute.xlu0 %1824
        %1826 = vrot.lane.b32.xlu0 %v1695, 125
        %v1827 = vpop.permute.xlu0 %1826
        %1828 = vrot.lane.b32.xlu0 %v1698, 125
        %v1829 = vpop.permute.xlu0 %1828
        %1830 = vrot.lane.b32.xlu0 %v1701, 125
        %v1831 = vpop.permute.xlu0 %1830
        %1832 = vrot.lane.b32.xlu0 %v1704, 125
        %v1833 = vpop.permute.xlu0 %1832
        %1834 = vrot.lane.b32.xlu0 %v1707, 125
        %v1835 = vpop.permute.xlu0 %1834
        %1836 = vrot.lane.b32.xlu0 %v1710, 125
        %v1837 = vpop.permute.xlu0 %1836
        %v1838 = vld [vmem:[%s14] sm:$0xff]
        %v1839 = vsel %vm962, %v1311, 0
        %v1841 = vsel %vm962, %v1312, 0
        %v1843 = vsel %vm962, %v1313, 0
        %v1845 = vsel %vm962, %v1314, 0
        %v1847 = vsel %vm962, %v1315, 0
        %v1849 = vsel %vm962, %v1316, 0
        %v1851 = vsel %vm962, %v1719, 0
        %v1853 = vsel %vm962, %v1721, 0
        %v1855 = vsel %vm962, %v1723, 0
        %v1857 = vsel %vm962, %v1725, 0
        %v1859 = vsel %vm962, %v1727, 0
        %v1861 = vsel %vm962, %v1729, 0
        %v1863 = vsel %vm962, %v1731, 0
        %v1865 = vsel %vm962, %v1733, 0
        %v1867 = vsel %vm962, %v1735, 0
        %v1869 = vsel %vm962, %v1737, 0
        %v1871 = vsel %vm962, %v1739, 0
        %v1873 = vsel %vm962, %v1741, 0
        %v1875 = vsel %vm962, %v1743, 0
        %v1877 = vsel %vm962, %v1745, 0
        %v1879 = vsel %vm962, %v1747, 0
        %v1881 = vsel %vm962, %v1749, 0
        %v1883 = vsel %vm962, %v1751, 0
        %v1885 = vsel %vm962, %v1753, 0
        %1887 = vmatpush.msra.mxu0 0.0
        %1888 = vmatpush.msra.mxu0 0.0
        %1889 = vmatpush.msra.mxu0 0.0
        %1890 = vmatpush.msra.mxu0 0.0
        %1891 = vmatpush.msra.mxu0 0.0
        %1892 = vmatpush.msra.mxu0 0.0
        %1893 = vmatpush.msra.mxu0 0.0
        %1894 = vmatpush.msra.mxu0 0.0
        %1895 = vmatpush.msra.mxu0 0.0
        %1896 = vmatpush.msra.mxu0 0.0
        %1897 = vmatpush.msra.mxu0 0.0
        %1898 = vmatpush.msra.mxu0 0.0
        %1899 = vmatpush.msra.mxu0 0.0
        %1900 = vmatpush.msra.mxu0 0.0
        %1901 = vmatpush.msra.mxu0 0.0
        %1902 = vmatpush.msra.mxu0 %v1838
        %1903 = vmatmul.f32.gmra.mxu0 %v1839
        %v1904 = vpop.f32.mrf.mxu0
        %v1905 = vadd.f32 0.0, %v1904
        %1906 = vmatmul.f32.gmra.mxu0 %v1841
        %v1907 = vpop.f32.mrf.mxu0
        %v1908 = vadd.f32 0.0, %v1907
        %1909 = vmatmul.f32.gmra.mxu0 %v1843
        %v1910 = vpop.f32.mrf.mxu0
        %v1911 = vadd.f32 0.0, %v1910
        %1912 = vmatmul.f32.gmra.mxu0 %v1845
        %v1913 = vpop.f32.mrf.mxu0
        %v1914 = vadd.f32 0.0, %v1913
        %1915 = vmatmul.f32.gmra.mxu0 %v1847
        %v1916 = vpop.f32.mrf.mxu0
        %v1917 = vadd.f32 0.0, %v1916
        %1918 = vmatmul.f32.gmra.mxu0 %v1849
        %v1919 = vpop.f32.mrf.mxu0
        %v1920 = vadd.f32 0.0, %v1919
        %1921 = vmatmul.f32.gmra.mxu0 %v1851
        %v1922 = vpop.f32.mrf.mxu0
        %v1923 = vadd.f32 0.0, %v1922
        %1924 = vmatmul.f32.gmra.mxu0 %v1853
        %v1925 = vpop.f32.mrf.mxu0
        %v1926 = vadd.f32 0.0, %v1925
        %1927 = vmatmul.f32.gmra.mxu0 %v1855
        %v1928 = vpop.f32.mrf.mxu0
        %v1929 = vadd.f32 0.0, %v1928
        %1930 = vmatmul.f32.gmra.mxu0 %v1857
        %v1931 = vpop.f32.mrf.mxu0
        %v1932 = vadd.f32 0.0, %v1931
        %1933 = vmatmul.f32.gmra.mxu0 %v1859
        %v1934 = vpop.f32.mrf.mxu0
        %v1935 = vadd.f32 0.0, %v1934
        %1936 = vmatmul.f32.gmra.mxu0 %v1861
        %v1937 = vpop.f32.mrf.mxu0
        %v1938 = vadd.f32 0.0, %v1937
        %1939 = vmatmul.f32.gmra.mxu0 %v1863
        %v1940 = vpop.f32.mrf.mxu0
        %v1941 = vadd.f32 0.0, %v1940
        %1942 = vmatmul.f32.gmra.mxu0 %v1865
        %v1943 = vpop.f32.mrf.mxu0
        %v1944 = vadd.f32 0.0, %v1943
        %1945 = vmatmul.f32.gmra.mxu0 %v1867
        %v1946 = vpop.f32.mrf.mxu0
        %v1947 = vadd.f32 0.0, %v1946
        %1948 = vmatmul.f32.gmra.mxu0 %v1869
        %v1949 = vpop.f32.mrf.mxu0
        %v1950 = vadd.f32 0.0, %v1949
        %1951 = vmatmul.f32.gmra.mxu0 %v1871
        %v1952 = vpop.f32.mrf.mxu0
        %v1953 = vadd.f32 0.0, %v1952
        %1954 = vmatmul.f32.gmra.mxu0 %v1873
        %v1955 = vpop.f32.mrf.mxu0
        %v1956 = vadd.f32 0.0, %v1955
        %1957 = vmatmul.f32.gmra.mxu0 %v1875
        %v1958 = vpop.f32.mrf.mxu0
        %v1959 = vadd.f32 0.0, %v1958
        %1960 = vmatmul.f32.gmra.mxu0 %v1877
        %v1961 = vpop.f32.mrf.mxu0
        %v1962 = vadd.f32 0.0, %v1961
        %1963 = vmatmul.f32.gmra.mxu0 %v1879
        %v1964 = vpop.f32.mrf.mxu0
        %v1965 = vadd.f32 0.0, %v1964
        %1966 = vmatmul.f32.gmra.mxu0 %v1881
        %v1967 = vpop.f32.mrf.mxu0
        %v1968 = vadd.f32 0.0, %v1967
        %1969 = vmatmul.f32.gmra.mxu0 %v1883
        %v1970 = vpop.f32.mrf.mxu0
        %v1971 = vadd.f32 0.0, %v1970
        %1972 = vmatmul.f32.gmra.mxu0 %v1885
        %v1973 = vpop.f32.mrf.mxu0
        %v1974 = vadd.f32 0.0, %v1973
        %1975 = vdwg.mxu0
        %v1976 = vld [vmem:[%s15] sm:$0xff]
        %v1977 = vsel %vm962, %v1412, 0
        %v1979 = vsel %vm962, %v1413, 0
        %v1981 = vsel %vm962, %v1414, 0
        %v1983 = vsel %vm962, %v1415, 0
        %v1985 = vsel %vm962, %v1416, 0
        %v1987 = vsel %vm962, %v1417, 0
        %v1989 = vsel %vm962, %v1761, 0
        %v1991 = vsel %vm962, %v1763, 0
        %v1993 = vsel %vm962, %v1765, 0
        %v1995 = vsel %vm962, %v1767, 0
        %v1997 = vsel %vm962, %v1769, 0
        %v1999 = vsel %vm962, %v1771, 0
        %v2001 = vsel %vm962, %v1773, 0
        %v2003 = vsel %vm962, %v1775, 0
        %v2005 = vsel %vm962, %v1777, 0
        %v2007 = vsel %vm962, %v1779, 0
        %v2009 = vsel %vm962, %v1781, 0
        %v2011 = vsel %vm962, %v1783, 0
        %v2013 = vsel %vm962, %v1785, 0
        %v2015 = vsel %vm962, %v1787, 0
        %v2017 = vsel %vm962, %v1789, 0
        %v2019 = vsel %vm962, %v1791, 0
        %v2021 = vsel %vm962, %v1793, 0
        %v2023 = vsel %vm962, %v1795, 0
        %2025 = vmatpush.msra.mxu0 0.0
        %2026 = vmatpush.msra.mxu0 0.0
        %2027 = vmatpush.msra.mxu0 0.0
        %2028 = vmatpush.msra.mxu0 0.0
        %2029 = vmatpush.msra.mxu0 0.0
        %2030 = vmatpush.msra.mxu0 0.0
        %2031 = vmatpush.msra.mxu0 0.0
        %2032 = vmatpush.msra.mxu0 0.0
        %2033 = vmatpush.msra.mxu0 0.0
        %2034 = vmatpush.msra.mxu0 0.0
        %2035 = vmatpush.msra.mxu0 0.0
        %2036 = vmatpush.msra.mxu0 0.0
        %2037 = vmatpush.msra.mxu0 0.0
        %2038 = vmatpush.msra.mxu0 0.0
        %2039 = vmatpush.msra.mxu0 0.0
        %2040 = vmatpush.msra.mxu0 %v1976
        %2041 = vmatmul.f32.gmra.mxu0 %v1977
        %v2042 = vpop.f32.mrf.mxu0
        %v2043 = vadd.f32 0.0, %v2042
        %2044 = vmatmul.f32.gmra.mxu0 %v1979
        %v2045 = vpop.f32.mrf.mxu0
        %v2046 = vadd.f32 0.0, %v2045
        %2047 = vmatmul.f32.gmra.mxu0 %v1981
        %v2048 = vpop.f32.mrf.mxu0
        %v2049 = vadd.f32 0.0, %v2048
        %2050 = vmatmul.f32.gmra.mxu0 %v1983
        %v2051 = vpop.f32.mrf.mxu0
        %v2052 = vadd.f32 0.0, %v2051
        %2053 = vmatmul.f32.gmra.mxu0 %v1985
        %v2054 = vpop.f32.mrf.mxu0
        %v2055 = vadd.f32 0.0, %v2054
        %2056 = vmatmul.f32.gmra.mxu0 %v1987
        %v2057 = vpop.f32.mrf.mxu0
        %v2058 = vadd.f32 0.0, %v2057
        %2059 = vmatmul.f32.gmra.mxu0 %v1989
        %v2060 = vpop.f32.mrf.mxu0
        %v2061 = vadd.f32 0.0, %v2060
        %2062 = vmatmul.f32.gmra.mxu0 %v1991
        %v2063 = vpop.f32.mrf.mxu0
        %v2064 = vadd.f32 0.0, %v2063
        %2065 = vmatmul.f32.gmra.mxu0 %v1993
        %v2066 = vpop.f32.mrf.mxu0
        %v2067 = vadd.f32 0.0, %v2066
        %2068 = vmatmul.f32.gmra.mxu0 %v1995
        %v2069 = vpop.f32.mrf.mxu0
        %v2070 = vadd.f32 0.0, %v2069
        %2071 = vmatmul.f32.gmra.mxu0 %v1997
        %v2072 = vpop.f32.mrf.mxu0
        %v2073 = vadd.f32 0.0, %v2072
        %2074 = vmatmul.f32.gmra.mxu0 %v1999
        %v2075 = vpop.f32.mrf.mxu0
        %v2076 = vadd.f32 0.0, %v2075
        %2077 = vmatmul.f32.gmra.mxu0 %v2001
        %v2078 = vpop.f32.mrf.mxu0
        %v2079 = vadd.f32 0.0, %v2078
        %2080 = vmatmul.f32.gmra.mxu0 %v2003
        %v2081 = vpop.f32.mrf.mxu0
        %v2082 = vadd.f32 0.0, %v2081
        %2083 = vmatmul.f32.gmra.mxu0 %v2005
        %v2084 = vpop.f32.mrf.mxu0
        %v2085 = vadd.f32 0.0, %v2084
        %2086 = vmatmul.f32.gmra.mxu0 %v2007
        %v2087 = vpop.f32.mrf.mxu0
        %v2088 = vadd.f32 0.0, %v2087
        %2089 = vmatmul.f32.gmra.mxu0 %v2009
        %v2090 = vpop.f32.mrf.mxu0
        %v2091 = vadd.f32 0.0, %v2090
        %2092 = vmatmul.f32.gmra.mxu0 %v2011
        %v2093 = vpop.f32.mrf.mxu0
        %v2094 = vadd.f32 0.0, %v2093
        %2095 = vmatmul.f32.gmra.mxu0 %v2013
        %v2096 = vpop.f32.mrf.mxu0
        %v2097 = vadd.f32 0.0, %v2096
        %2098 = vmatmul.f32.gmra.mxu0 %v2015
        %v2099 = vpop.f32.mrf.mxu0
        %v2100 = vadd.f32 0.0, %v2099
        %2101 = vmatmul.f32.gmra.mxu0 %v2017
        %v2102 = vpop.f32.mrf.mxu0
        %v2103 = vadd.f32 0.0, %v2102
        %2104 = vmatmul.f32.gmra.mxu0 %v2019
        %v2105 = vpop.f32.mrf.mxu0
        %v2106 = vadd.f32 0.0, %v2105
        %2107 = vmatmul.f32.gmra.mxu0 %v2021
        %v2108 = vpop.f32.mrf.mxu0
        %v2109 = vadd.f32 0.0, %v2108
        %2110 = vmatmul.f32.gmra.mxu0 %v2023
        %v2111 = vpop.f32.mrf.mxu0
        %v2112 = vadd.f32 0.0, %v2111
        %2113 = vdwg.mxu0
        %v2114 = vmul.f32 %v1905, %v2043
        %v2115 = vmul.f32 %v1908, %v2046
        %v2116 = vmul.f32 %v1911, %v2049
        %v2117 = vmul.f32 %v1914, %v2052
        %v2118 = vmul.f32 %v1917, %v2055
        %v2119 = vmul.f32 %v1920, %v2058
        %v2120 = vmul.f32 %v1923, %v2061
        %v2121 = vmul.f32 %v1926, %v2064
        %v2122 = vmul.f32 %v1929, %v2067
        %v2123 = vmul.f32 %v1932, %v2070
        %v2124 = vmul.f32 %v1935, %v2073
        %v2125 = vmul.f32 %v1938, %v2076
        %v2126 = vmul.f32 %v1941, %v2079
        %v2127 = vmul.f32 %v1944, %v2082
        %v2128 = vmul.f32 %v1947, %v2085
        %v2129 = vmul.f32 %v1950, %v2088
        %v2130 = vmul.f32 %v1953, %v2091
        %v2131 = vmul.f32 %v1956, %v2094
        %v2132 = vmul.f32 %v1959, %v2097
        %v2133 = vmul.f32 %v1962, %v2100
        %v2134 = vmul.f32 %v1965, %v2103
        %v2135 = vmul.f32 %v1968, %v2106
        %v2136 = vmul.f32 %v1971, %v2109
        %v2137 = vmul.f32 %v1974, %v2112
        %v2138 = vxor.u32 %v2114, 2147483648
        %v2139 = vxor.u32 %v2115, 2147483648
        %v2140 = vxor.u32 %v2116, 2147483648
        %v2141 = vxor.u32 %v2117, 2147483648
        %v2142 = vxor.u32 %v2118, 2147483648
        %v2143 = vxor.u32 %v2119, 2147483648
        %v2144 = vxor.u32 %v2120, 2147483648
        %v2145 = vxor.u32 %v2121, 2147483648
        %v2146 = vxor.u32 %v2122, 2147483648
        %v2147 = vxor.u32 %v2123, 2147483648
        %v2148 = vxor.u32 %v2124, 2147483648
        %v2149 = vxor.u32 %v2125, 2147483648
        %v2150 = vxor.u32 %v2126, 2147483648
        %v2151 = vxor.u32 %v2127, 2147483648
        %v2152 = vxor.u32 %v2128, 2147483648
        %v2153 = vxor.u32 %v2129, 2147483648
        %v2154 = vxor.u32 %v2130, 2147483648
        %v2155 = vxor.u32 %v2131, 2147483648
        %v2156 = vxor.u32 %v2132, 2147483648
        %v2157 = vxor.u32 %v2133, 2147483648
        %v2158 = vxor.u32 %v2134, 2147483648
        %v2159 = vxor.u32 %v2135, 2147483648
        %v2160 = vxor.u32 %v2136, 2147483648
        %v2161 = vxor.u32 %v2137, 2147483648
        %v2162 = vmul.f32 %v2138, 1.442695
        %v2163 = vpow.pop %v2162
        %v2164 = vmul.f32 %v2139, 1.442695
        %v2165 = vpow.pop %v2164
        %v2166 = vmul.f32 %v2140, 1.442695
        %v2167 = vpow.pop %v2166
        %v2168 = vmul.f32 %v2141, 1.442695
        %v2169 = vpow.pop %v2168
        %v2170 = vmul.f32 %v2142, 1.442695
        %v2171 = vpow.pop %v2170
        %v2172 = vmul.f32 %v2143, 1.442695
        %v2173 = vpow.pop %v2172
        %v2174 = vmul.f32 %v2144, 1.442695
        %v2175 = vpow.pop %v2174
        %v2176 = vmul.f32 %v2145, 1.442695
        %v2177 = vpow.pop %v2176
        %v2178 = vmul.f32 %v2146, 1.442695
        %v2179 = vpow.pop %v2178
        %v2180 = vmul.f32 %v2147, 1.442695
        %v2181 = vpow.pop %v2180
        %v2182 = vmul.f32 %v2148, 1.442695
        %v2183 = vpow.pop %v2182
        %v2184 = vmul.f32 %v2149, 1.442695
        %v2185 = vpow.pop %v2184
        %v2186 = vmul.f32 %v2150, 1.442695
        %v2187 = vpow.pop %v2186
        %v2188 = vmul.f32 %v2151, 1.442695
        %v2189 = vpow.pop %v2188
        %v2190 = vmul.f32 %v2152, 1.442695
        %v2191 = vpow.pop %v2190
        %v2192 = vmul.f32 %v2153, 1.442695
        %v2193 = vpow.pop %v2192
        %v2194 = vmul.f32 %v2154, 1.442695
        %v2195 = vpow.pop %v2194
        %v2196 = vmul.f32 %v2155, 1.442695
        %v2197 = vpow.pop %v2196
        %v2198 = vmul.f32 %v2156, 1.442695
        %v2199 = vpow.pop %v2198
        %v2200 = vmul.f32 %v2157, 1.442695
        %v2201 = vpow.pop %v2200
        %v2202 = vmul.f32 %v2158, 1.442695
        %v2203 = vpow.pop %v2202
        %v2204 = vmul.f32 %v2159, 1.442695
        %v2205 = vpow.pop %v2204
        %v2206 = vmul.f32 %v2160, 1.442695
        %v2207 = vpow.pop %v2206
        %v2208 = vmul.f32 %v2161, 1.442695
        %v2209 = vpow.pop %v2208
        %v2210 = vadd.f32 %v2163, 1.0
        %v2211 = vadd.f32 %v2165, 1.0
        %v2212 = vadd.f32 %v2167, 1.0
        %v2213 = vadd.f32 %v2169, 1.0
        %v2214 = vadd.f32 %v2171, 1.0
        %v2215 = vadd.f32 %v2173, 1.0
        %v2216 = vadd.f32 %v2175, 1.0
        %v2217 = vadd.f32 %v2177, 1.0
        %v2218 = vadd.f32 %v2179, 1.0
        %v2219 = vadd.f32 %v2181, 1.0
        %v2220 = vadd.f32 %v2183, 1.0
        %v2221 = vadd.f32 %v2185, 1.0
        %v2222 = vadd.f32 %v2187, 1.0
        %v2223 = vadd.f32 %v2189, 1.0
        %v2224 = vadd.f32 %v2191, 1.0
        %v2225 = vadd.f32 %v2193, 1.0
        %v2226 = vadd.f32 %v2195, 1.0
        %v2227 = vadd.f32 %v2197, 1.0
        %v2228 = vadd.f32 %v2199, 1.0
        %v2229 = vadd.f32 %v2201, 1.0
        %v2230 = vadd.f32 %v2203, 1.0
        %v2231 = vadd.f32 %v2205, 1.0
        %v2232 = vadd.f32 %v2207, 1.0
        %v2233 = vadd.f32 %v2209, 1.0
        %v2234 = vrcp.pop %v2210
        %v2235 = vmul.f32 %v2210, %v2234
        %v2236 = vsub.f32 1.0, %v2235
        %v2237 = vmul.f32 %v2234, %v2236
        %v2238 = vadd.f32 %v2234, %v2237
        %vm2239 = vweird.f32 %v2210
        %vm2240 = vweird.f32 %v2234
        %vm2241 = vmor %vm2239, %vm2240
        %v2242 = vsel %vm2241, %v2234, %v2238
        %v2243 = vand.u32 2147483647, %v2210
        %vm2244 = vcmp.eq.f32.partialorder %v2243, 8.507059e+37
        %v2245 = vand.u32 %v2210, 2147483648
        %v2246 = vor.u32 1.1754944e-38, %v2245
        %v2247 = vsel %vm2244, %v2246, %v2242
        %v2248 = vmul.f32 1.0, %v2247
        %v2249 = vrcp.pop %v2211
        %v2250 = vmul.f32 %v2211, %v2249
        %v2251 = vsub.f32 1.0, %v2250
        %v2252 = vmul.f32 %v2249, %v2251
        %v2253 = vadd.f32 %v2249, %v2252
        %vm2254 = vweird.f32 %v2211
        %vm2255 = vweird.f32 %v2249
        %vm2256 = vmor %vm2254, %vm2255
        %v2257 = vsel %vm2256, %v2249, %v2253
        %v2258 = vand.u32 2147483647, %v2211
        %vm2259 = vcmp.eq.f32.partialorder %v2258, 8.507059e+37
        %v2260 = vand.u32 %v2211, 2147483648
        %v2261 = vor.u32 1.1754944e-38, %v2260
        %v2262 = vsel %vm2259, %v2261, %v2257
        %v2263 = vmul.f32 1.0, %v2262
        %v2264 = vrcp.pop %v2212
        %v2265 = vmul.f32 %v2212, %v2264
        %v2266 = vsub.f32 1.0, %v2265
        %v2267 = vmul.f32 %v2264, %v2266
        %v2268 = vadd.f32 %v2264, %v2267
        %vm2269 = vweird.f32 %v2212
        %vm2270 = vweird.f32 %v2264
        %vm2271 = vmor %vm2269, %vm2270
        %v2272 = vsel %vm2271, %v2264, %v2268
        %v2273 = vand.u32 2147483647, %v2212
        %vm2274 = vcmp.eq.f32.partialorder %v2273, 8.507059e+37
        %v2275 = vand.u32 %v2212, 2147483648
        %v2276 = vor.u32 1.1754944e-38, %v2275
        %v2277 = vsel %vm2274, %v2276, %v2272
        %v2278 = vmul.f32 1.0, %v2277
        %v2279 = vrcp.pop %v2213
        %v2280 = vmul.f32 %v2213, %v2279
        %v2281 = vsub.f32 1.0, %v2280
        %v2282 = vmul.f32 %v2279, %v2281
        %v2283 = vadd.f32 %v2279, %v2282
        %vm2284 = vweird.f32 %v2213
        %vm2285 = vweird.f32 %v2279
        %vm2286 = vmor %vm2284, %vm2285
        %v2287 = vsel %vm2286, %v2279, %v2283
        %v2288 = vand.u32 2147483647, %v2213
        %vm2289 = vcmp.eq.f32.partialorder %v2288, 8.507059e+37
        %v2290 = vand.u32 %v2213, 2147483648
        %v2291 = vor.u32 1.1754944e-38, %v2290
        %v2292 = vsel %vm2289, %v2291, %v2287
        %v2293 = vmul.f32 1.0, %v2292
        %v2294 = vrcp.pop %v2214
        %v2295 = vmul.f32 %v2214, %v2294
        %v2296 = vsub.f32 1.0, %v2295
        %v2297 = vmul.f32 %v2294, %v2296
        %v2298 = vadd.f32 %v2294, %v2297
        %vm2299 = vweird.f32 %v2214
        %vm2300 = vweird.f32 %v2294
        %vm2301 = vmor %vm2299, %vm2300
        %v2302 = vsel %vm2301, %v2294, %v2298
        %v2303 = vand.u32 2147483647, %v2214
        %vm2304 = vcmp.eq.f32.partialorder %v2303, 8.507059e+37
        %v2305 = vand.u32 %v2214, 2147483648
        %v2306 = vor.u32 1.1754944e-38, %v2305
        %v2307 = vsel %vm2304, %v2306, %v2302
        %v2308 = vmul.f32 1.0, %v2307
        %v2309 = vrcp.pop %v2215
        %v2310 = vmul.f32 %v2215, %v2309
        %v2311 = vsub.f32 1.0, %v2310
        %v2312 = vmul.f32 %v2309, %v2311
        %v2313 = vadd.f32 %v2309, %v2312
        %vm2314 = vweird.f32 %v2215
        %vm2315 = vweird.f32 %v2309
        %vm2316 = vmor %vm2314, %vm2315
        %v2317 = vsel %vm2316, %v2309, %v2313
        %v2318 = vand.u32 2147483647, %v2215
        %vm2319 = vcmp.eq.f32.partialorder %v2318, 8.507059e+37
        %v2320 = vand.u32 %v2215, 2147483648
        %v2321 = vor.u32 1.1754944e-38, %v2320
        %v2322 = vsel %vm2319, %v2321, %v2317
        %v2323 = vmul.f32 1.0, %v2322
        %v2324 = vrcp.pop %v2216
        %v2325 = vmul.f32 %v2216, %v2324
        %v2326 = vsub.f32 1.0, %v2325
        %v2327 = vmul.f32 %v2324, %v2326
        %v2328 = vadd.f32 %v2324, %v2327
        %vm2329 = vweird.f32 %v2216
        %vm2330 = vweird.f32 %v2324
        %vm2331 = vmor %vm2329, %vm2330
        %v2332 = vsel %vm2331, %v2324, %v2328
        %v2333 = vand.u32 2147483647, %v2216
        %vm2334 = vcmp.eq.f32.partialorder %v2333, 8.507059e+37
        %v2335 = vand.u32 %v2216, 2147483648
        %v2336 = vor.u32 1.1754944e-38, %v2335
        %v2337 = vsel %vm2334, %v2336, %v2332
        %v2338 = vmul.f32 1.0, %v2337
        %v2339 = vrcp.pop %v2217
        %v2340 = vmul.f32 %v2217, %v2339
        %v2341 = vsub.f32 1.0, %v2340
        %v2342 = vmul.f32 %v2339, %v2341
        %v2343 = vadd.f32 %v2339, %v2342
        %vm2344 = vweird.f32 %v2217
        %vm2345 = vweird.f32 %v2339
        %vm2346 = vmor %vm2344, %vm2345
        %v2347 = vsel %vm2346, %v2339, %v2343
        %v2348 = vand.u32 2147483647, %v2217
        %vm2349 = vcmp.eq.f32.partialorder %v2348, 8.507059e+37
        %v2350 = vand.u32 %v2217, 2147483648
        %v2351 = vor.u32 1.1754944e-38, %v2350
        %v2352 = vsel %vm2349, %v2351, %v2347
        %v2353 = vmul.f32 1.0, %v2352
        %v2354 = vrcp.pop %v2218
        %v2355 = vmul.f32 %v2218, %v2354
        %v2356 = vsub.f32 1.0, %v2355
        %v2357 = vmul.f32 %v2354, %v2356
        %v2358 = vadd.f32 %v2354, %v2357
        %vm2359 = vweird.f32 %v2218
        %vm2360 = vweird.f32 %v2354
        %vm2361 = vmor %vm2359, %vm2360
        %v2362 = vsel %vm2361, %v2354, %v2358
        %v2363 = vand.u32 2147483647, %v2218
        %vm2364 = vcmp.eq.f32.partialorder %v2363, 8.507059e+37
        %v2365 = vand.u32 %v2218, 2147483648
        %v2366 = vor.u32 1.1754944e-38, %v2365
        %v2367 = vsel %vm2364, %v2366, %v2362
        %v2368 = vmul.f32 1.0, %v2367
        %v2369 = vrcp.pop %v2219
        %v2370 = vmul.f32 %v2219, %v2369
        %v2371 = vsub.f32 1.0, %v2370
        %v2372 = vmul.f32 %v2369, %v2371
        %v2373 = vadd.f32 %v2369, %v2372
        %vm2374 = vweird.f32 %v2219
        %vm2375 = vweird.f32 %v2369
        %vm2376 = vmor %vm2374, %vm2375
        %v2377 = vsel %vm2376, %v2369, %v2373
        %v2378 = vand.u32 2147483647, %v2219
        %vm2379 = vcmp.eq.f32.partialorder %v2378, 8.507059e+37
        %v2380 = vand.u32 %v2219, 2147483648
        %v2381 = vor.u32 1.1754944e-38, %v2380
        %v2382 = vsel %vm2379, %v2381, %v2377
        %v2383 = vmul.f32 1.0, %v2382
        %v2384 = vrcp.pop %v2220
        %v2385 = vmul.f32 %v2220, %v2384
        %v2386 = vsub.f32 1.0, %v2385
        %v2387 = vmul.f32 %v2384, %v2386
        %v2388 = vadd.f32 %v2384, %v2387
        %vm2389 = vweird.f32 %v2220
        %vm2390 = vweird.f32 %v2384
        %vm2391 = vmor %vm2389, %vm2390
        %v2392 = vsel %vm2391, %v2384, %v2388
        %v2393 = vand.u32 2147483647, %v2220
        %vm2394 = vcmp.eq.f32.partialorder %v2393, 8.507059e+37
        %v2395 = vand.u32 %v2220, 2147483648
        %v2396 = vor.u32 1.1754944e-38, %v2395
        %v2397 = vsel %vm2394, %v2396, %v2392
        %v2398 = vmul.f32 1.0, %v2397
        %v2399 = vrcp.pop %v2221
        %v2400 = vmul.f32 %v2221, %v2399
        %v2401 = vsub.f32 1.0, %v2400
        %v2402 = vmul.f32 %v2399, %v2401
        %v2403 = vadd.f32 %v2399, %v2402
        %vm2404 = vweird.f32 %v2221
        %vm2405 = vweird.f32 %v2399
        %vm2406 = vmor %vm2404, %vm2405
        %v2407 = vsel %vm2406, %v2399, %v2403
        %v2408 = vand.u32 2147483647, %v2221
        %vm2409 = vcmp.eq.f32.partialorder %v2408, 8.507059e+37
        %v2410 = vand.u32 %v2221, 2147483648
        %v2411 = vor.u32 1.1754944e-38, %v2410
        %v2412 = vsel %vm2409, %v2411, %v2407
        %v2413 = vmul.f32 1.0, %v2412
        %v2414 = vrcp.pop %v2222
        %v2415 = vmul.f32 %v2222, %v2414
        %v2416 = vsub.f32 1.0, %v2415
        %v2417 = vmul.f32 %v2414, %v2416
        %v2418 = vadd.f32 %v2414, %v2417
        %vm2419 = vweird.f32 %v2222
        %vm2420 = vweird.f32 %v2414
        %vm2421 = vmor %vm2419, %vm2420
        %v2422 = vsel %vm2421, %v2414, %v2418
        %v2423 = vand.u32 2147483647, %v2222
        %vm2424 = vcmp.eq.f32.partialorder %v2423, 8.507059e+37
        %v2425 = vand.u32 %v2222, 2147483648
        %v2426 = vor.u32 1.1754944e-38, %v2425
        %v2427 = vsel %vm2424, %v2426, %v2422
        %v2428 = vmul.f32 1.0, %v2427
        %v2429 = vrcp.pop %v2223
        %v2430 = vmul.f32 %v2223, %v2429
        %v2431 = vsub.f32 1.0, %v2430
        %v2432 = vmul.f32 %v2429, %v2431
        %v2433 = vadd.f32 %v2429, %v2432
        %vm2434 = vweird.f32 %v2223
        %vm2435 = vweird.f32 %v2429
        %vm2436 = vmor %vm2434, %vm2435
        %v2437 = vsel %vm2436, %v2429, %v2433
        %v2438 = vand.u32 2147483647, %v2223
        %vm2439 = vcmp.eq.f32.partialorder %v2438, 8.507059e+37
        %v2440 = vand.u32 %v2223, 2147483648
        %v2441 = vor.u32 1.1754944e-38, %v2440
        %v2442 = vsel %vm2439, %v2441, %v2437
        %v2443 = vmul.f32 1.0, %v2442
        %v2444 = vrcp.pop %v2224
        %v2445 = vmul.f32 %v2224, %v2444
        %v2446 = vsub.f32 1.0, %v2445
        %v2447 = vmul.f32 %v2444, %v2446
        %v2448 = vadd.f32 %v2444, %v2447
        %vm2449 = vweird.f32 %v2224
        %vm2450 = vweird.f32 %v2444
        %vm2451 = vmor %vm2449, %vm2450
        %v2452 = vsel %vm2451, %v2444, %v2448
        %v2453 = vand.u32 2147483647, %v2224
        %vm2454 = vcmp.eq.f32.partialorder %v2453, 8.507059e+37
        %v2455 = vand.u32 %v2224, 2147483648
        %v2456 = vor.u32 1.1754944e-38, %v2455
        %v2457 = vsel %vm2454, %v2456, %v2452
        %v2458 = vmul.f32 1.0, %v2457
        %v2459 = vrcp.pop %v2225
        %v2460 = vmul.f32 %v2225, %v2459
        %v2461 = vsub.f32 1.0, %v2460
        %v2462 = vmul.f32 %v2459, %v2461
        %v2463 = vadd.f32 %v2459, %v2462
        %vm2464 = vweird.f32 %v2225
        %vm2465 = vweird.f32 %v2459
        %vm2466 = vmor %vm2464, %vm2465
        %v2467 = vsel %vm2466, %v2459, %v2463
        %v2468 = vand.u32 2147483647, %v2225
        %vm2469 = vcmp.eq.f32.partialorder %v2468, 8.507059e+37
        %v2470 = vand.u32 %v2225, 2147483648
        %v2471 = vor.u32 1.1754944e-38, %v2470
        %v2472 = vsel %vm2469, %v2471, %v2467
        %v2473 = vmul.f32 1.0, %v2472
        %v2474 = vrcp.pop %v2226
        %v2475 = vmul.f32 %v2226, %v2474
        %v2476 = vsub.f32 1.0, %v2475
        %v2477 = vmul.f32 %v2474, %v2476
        %v2478 = vadd.f32 %v2474, %v2477
        %vm2479 = vweird.f32 %v2226
        %vm2480 = vweird.f32 %v2474
        %vm2481 = vmor %vm2479, %vm2480
        %v2482 = vsel %vm2481, %v2474, %v2478
        %v2483 = vand.u32 2147483647, %v2226
        %vm2484 = vcmp.eq.f32.partialorder %v2483, 8.507059e+37
        %v2485 = vand.u32 %v2226, 2147483648
        %v2486 = vor.u32 1.1754944e-38, %v2485
        %v2487 = vsel %vm2484, %v2486, %v2482
        %v2488 = vmul.f32 1.0, %v2487
        %v2489 = vrcp.pop %v2227
        %v2490 = vmul.f32 %v2227, %v2489
        %v2491 = vsub.f32 1.0, %v2490
        %v2492 = vmul.f32 %v2489, %v2491
        %v2493 = vadd.f32 %v2489, %v2492
        %vm2494 = vweird.f32 %v2227
        %vm2495 = vweird.f32 %v2489
        %vm2496 = vmor %vm2494, %vm2495
        %v2497 = vsel %vm2496, %v2489, %v2493
        %v2498 = vand.u32 2147483647, %v2227
        %vm2499 = vcmp.eq.f32.partialorder %v2498, 8.507059e+37
        %v2500 = vand.u32 %v2227, 2147483648
        %v2501 = vor.u32 1.1754944e-38, %v2500
        %v2502 = vsel %vm2499, %v2501, %v2497
        %v2503 = vmul.f32 1.0, %v2502
        %v2504 = vrcp.pop %v2228
        %v2505 = vmul.f32 %v2228, %v2504
        %v2506 = vsub.f32 1.0, %v2505
        %v2507 = vmul.f32 %v2504, %v2506
        %v2508 = vadd.f32 %v2504, %v2507
        %vm2509 = vweird.f32 %v2228
        %vm2510 = vweird.f32 %v2504
        %vm2511 = vmor %vm2509, %vm2510
        %v2512 = vsel %vm2511, %v2504, %v2508
        %v2513 = vand.u32 2147483647, %v2228
        %vm2514 = vcmp.eq.f32.partialorder %v2513, 8.507059e+37
        %v2515 = vand.u32 %v2228, 2147483648
        %v2516 = vor.u32 1.1754944e-38, %v2515
        %v2517 = vsel %vm2514, %v2516, %v2512
        %v2518 = vmul.f32 1.0, %v2517
        %v2519 = vrcp.pop %v2229
        %v2520 = vmul.f32 %v2229, %v2519
        %v2521 = vsub.f32 1.0, %v2520
        %v2522 = vmul.f32 %v2519, %v2521
        %v2523 = vadd.f32 %v2519, %v2522
        %vm2524 = vweird.f32 %v2229
        %vm2525 = vweird.f32 %v2519
        %vm2526 = vmor %vm2524, %vm2525
        %v2527 = vsel %vm2526, %v2519, %v2523
        %v2528 = vand.u32 2147483647, %v2229
        %vm2529 = vcmp.eq.f32.partialorder %v2528, 8.507059e+37
        %v2530 = vand.u32 %v2229, 2147483648
        %v2531 = vor.u32 1.1754944e-38, %v2530
        %v2532 = vsel %vm2529, %v2531, %v2527
        %v2533 = vmul.f32 1.0, %v2532
        %v2534 = vrcp.pop %v2230
        %v2535 = vmul.f32 %v2230, %v2534
        %v2536 = vsub.f32 1.0, %v2535
        %v2537 = vmul.f32 %v2534, %v2536
        %v2538 = vadd.f32 %v2534, %v2537
        %vm2539 = vweird.f32 %v2230
        %vm2540 = vweird.f32 %v2534
        %vm2541 = vmor %vm2539, %vm2540
        %v2542 = vsel %vm2541, %v2534, %v2538
        %v2543 = vand.u32 2147483647, %v2230
        %vm2544 = vcmp.eq.f32.partialorder %v2543, 8.507059e+37
        %v2545 = vand.u32 %v2230, 2147483648
        %v2546 = vor.u32 1.1754944e-38, %v2545
        %v2547 = vsel %vm2544, %v2546, %v2542
        %v2548 = vmul.f32 1.0, %v2547
        %v2549 = vrcp.pop %v2231
        %v2550 = vmul.f32 %v2231, %v2549
        %v2551 = vsub.f32 1.0, %v2550
        %v2552 = vmul.f32 %v2549, %v2551
        %v2553 = vadd.f32 %v2549, %v2552
        %vm2554 = vweird.f32 %v2231
        %vm2555 = vweird.f32 %v2549
        %vm2556 = vmor %vm2554, %vm2555
        %v2557 = vsel %vm2556, %v2549, %v2553
        %v2558 = vand.u32 2147483647, %v2231
        %vm2559 = vcmp.eq.f32.partialorder %v2558, 8.507059e+37
        %v2560 = vand.u32 %v2231, 2147483648
        %v2561 = vor.u32 1.1754944e-38, %v2560
        %v2562 = vsel %vm2559, %v2561, %v2557
        %v2563 = vmul.f32 1.0, %v2562
        %v2564 = vrcp.pop %v2232
        %v2565 = vmul.f32 %v2232, %v2564
        %v2566 = vsub.f32 1.0, %v2565
        %v2567 = vmul.f32 %v2564, %v2566
        %v2568 = vadd.f32 %v2564, %v2567
        %vm2569 = vweird.f32 %v2232
        %vm2570 = vweird.f32 %v2564
        %vm2571 = vmor %vm2569, %vm2570
        %v2572 = vsel %vm2571, %v2564, %v2568
        %v2573 = vand.u32 2147483647, %v2232
        %vm2574 = vcmp.eq.f32.partialorder %v2573, 8.507059e+37
        %v2575 = vand.u32 %v2232, 2147483648
        %v2576 = vor.u32 1.1754944e-38, %v2575
        %v2577 = vsel %vm2574, %v2576, %v2572
        %v2578 = vmul.f32 1.0, %v2577
        %v2579 = vrcp.pop %v2233
        %v2580 = vmul.f32 %v2233, %v2579
        %v2581 = vsub.f32 1.0, %v2580
        %v2582 = vmul.f32 %v2579, %v2581
        %v2583 = vadd.f32 %v2579, %v2582
        %vm2584 = vweird.f32 %v2233
        %vm2585 = vweird.f32 %v2579
        %vm2586 = vmor %vm2584, %vm2585
        %v2587 = vsel %vm2586, %v2579, %v2583
        %v2588 = vand.u32 2147483647, %v2233
        %vm2589 = vcmp.eq.f32.partialorder %v2588, 8.507059e+37
        %v2590 = vand.u32 %v2233, 2147483648
        %v2591 = vor.u32 1.1754944e-38, %v2590
        %v2592 = vsel %vm2589, %v2591, %v2587
        %v2593 = vmul.f32 1.0, %v2592
        %2594 = vset.pattern.permute.xlu0 0
        %2595 = vperm.xlu0 %2594, %v1695
        %v2596 = vpop.permute.xlu0 %2595
        %2598 = vset.pattern.permute.xlu0 0
        %2599 = vperm.xlu0 %2598, %v1698
        %v2600 = vpop.permute.xlu0 %2599
        %2602 = vset.pattern.permute.xlu0 0
        %2603 = vperm.xlu0 %2602, %v1701
        %v2604 = vpop.permute.xlu0 %2603
        %2606 = vset.pattern.permute.xlu0 0
        %2607 = vperm.xlu0 %2606, %v1704
        %v2608 = vpop.permute.xlu0 %2607
        %2610 = vset.pattern.permute.xlu0 0
        %2611 = vperm.xlu0 %2610, %v1707
        %v2612 = vpop.permute.xlu0 %2611
        %2614 = vset.pattern.permute.xlu0 0
        %2615 = vperm.xlu0 %2614, %v1710
        %v2616 = vpop.permute.xlu0 %2615
        %2618 = vset.pattern.permute.xlu0 0
        %2619 = vperm.xlu0 %2618, %v1803
        %v2620 = vpop.permute.xlu0 %2619
        %2622 = vset.pattern.permute.xlu0 0
        %2623 = vperm.xlu0 %2622, %v1805
        %v2624 = vpop.permute.xlu0 %2623
        %2626 = vset.pattern.permute.xlu0 0
        %2627 = vperm.xlu0 %2626, %v1807
        %v2628 = vpop.permute.xlu0 %2627
        %2630 = vset.pattern.permute.xlu0 0
        %2631 = vperm.xlu0 %2630, %v1809
        %v2632 = vpop.permute.xlu0 %2631
        %2634 = vset.pattern.permute.xlu0 0
        %2635 = vperm.xlu0 %2634, %v1811
        %v2636 = vpop.permute.xlu0 %2635
        %2638 = vset.pattern.permute.xlu0 0
        %2639 = vperm.xlu0 %2638, %v1813
        %v2640 = vpop.permute.xlu0 %2639
        %2642 = vset.pattern.permute.xlu0 0
        %2643 = vperm.xlu0 %2642, %v1815
        %v2644 = vpop.permute.xlu0 %2643
        %2646 = vset.pattern.permute.xlu0 0
        %2647 = vperm.xlu0 %2646, %v1817
        %v2648 = vpop.permute.xlu0 %2647
        %2650 = vset.pattern.permute.xlu0 0
        %2651 = vperm.xlu0 %2650, %v1819
        %v2652 = vpop.permute.xlu0 %2651
        %2654 = vset.pattern.permute.xlu0 0
        %2655 = vperm.xlu0 %2654, %v1821
        %v2656 = vpop.permute.xlu0 %2655
        %2658 = vset.pattern.permute.xlu0 0
        %2659 = vperm.xlu0 %2658, %v1823
        %v2660 = vpop.permute.xlu0 %2659
        %2662 = vset.pattern.permute.xlu0 0
        %2663 = vperm.xlu0 %2662, %v1825
        %v2664 = vpop.permute.xlu0 %2663
        %2666 = vset.pattern.permute.xlu0 0
        %2667 = vperm.xlu0 %2666, %v1827
        %v2668 = vpop.permute.xlu0 %2667
        %2670 = vset.pattern.permute.xlu0 0
        %2671 = vperm.xlu0 %2670, %v1829
        %v2672 = vpop.permute.xlu0 %2671
        %2674 = vset.pattern.permute.xlu0 0
        %2675 = vperm.xlu0 %2674, %v1831
        %v2676 = vpop.permute.xlu0 %2675
        %2678 = vset.pattern.permute.xlu0 0
        %2679 = vperm.xlu0 %2678, %v1833
        %v2680 = vpop.permute.xlu0 %2679
        %2682 = vset.pattern.permute.xlu0 0
        %2683 = vperm.xlu0 %2682, %v1835
        %v2684 = vpop.permute.xlu0 %2683
        %2686 = vset.pattern.permute.xlu0 0
        %2687 = vperm.xlu0 %2686, %v1837
        %v2688 = vpop.permute.xlu0 %2687
        %v2690 = vadd.f32 %v2248, %v2596
        %v2691 = vadd.f32 %v2263, %v2600
        %v2692 = vadd.f32 %v2278, %v2604
        %v2693 = vadd.f32 %v2293, %v2608
        %v2694 = vadd.f32 %v2308, %v2612
        %v2695 = vadd.f32 %v2323, %v2616
        %v2696 = vadd.f32 %v2338, %v2620
        %v2697 = vadd.f32 %v2353, %v2624
        %v2698 = vadd.f32 %v2368, %v2628
        %v2699 = vadd.f32 %v2383, %v2632
        %v2700 = vadd.f32 %v2398, %v2636
        %v2701 = vadd.f32 %v2413, %v2640
        %v2702 = vadd.f32 %v2428, %v2644
        %v2703 = vadd.f32 %v2443, %v2648
        %v2704 = vadd.f32 %v2458, %v2652
        %v2705 = vadd.f32 %v2473, %v2656
        %v2706 = vadd.f32 %v2488, %v2660
        %v2707 = vadd.f32 %v2503, %v2664
        %v2708 = vadd.f32 %v2518, %v2668
        %v2709 = vadd.f32 %v2533, %v2672
        %v2710 = vadd.f32 %v2548, %v2676
        %v2711 = vadd.f32 %v2563, %v2680
        %v2712 = vadd.f32 %v2578, %v2684
        %v2713 = vadd.f32 %v2593, %v2688
        %v2714 = vmul.f32 %v599, %v2690
        %v2715 = vmul.f32 %v600, %v2691
        %v2716 = vmul.f32 %v601, %v2692
        %v2717 = vmul.f32 %v602, %v2693
        %v2718 = vmul.f32 %v603, %v2694
        %v2719 = vmul.f32 %v604, %v2695
        %v2720 = vmul.f32 %v605, %v2696
        %v2721 = vmul.f32 %v606, %v2697
        %v2722 = vmul.f32 %v607, %v2698
        %v2723 = vmul.f32 %v608, %v2699
        %v2724 = vmul.f32 %v609, %v2700
        %v2725 = vmul.f32 %v610, %v2701
        %v2726 = vmul.f32 %v611, %v2702
        %v2727 = vmul.f32 %v612, %v2703
        %v2728 = vmul.f32 %v613, %v2704
        %v2729 = vmul.f32 %v614, %v2705
        %v2730 = vmul.f32 %v615, %v2706
        %v2731 = vmul.f32 %v616, %v2707
        %v2732 = vmul.f32 %v617, %v2708
        %v2733 = vmul.f32 %v618, %v2709
        %v2734 = vmul.f32 %v619, %v2710
        %v2735 = vmul.f32 %v620, %v2711
        %v2736 = vmul.f32 %v621, %v2712
        %v2737 = vmul.f32 %v622, %v2713
        %2738 = vst.msk [vmem:[%s596] sm:$0xff] %vm631, %v2714
        %2739 = vst.msk [vmem:[%s596 + $0x8] sm:$0xff] %vm631, %v2715
        %2740 = vst.msk [vmem:[%s596 + $0x10] sm:$0xff] %vm631, %v2716
        %2741 = vst.msk [vmem:[%s596 + $0x18] sm:$0xff] %vm631, %v2717
        %2742 = vst.msk [vmem:[%s596 + $0x20] sm:$0xff] %vm631, %v2718
        %2743 = vst.msk [vmem:[%s596 + $0x28] sm:$0xff] %vm631, %v2719
        %2744 = vst.msk [vmem:[%s596 + $0x30] sm:$0xff] %vm631, %v2720
        %2745 = vst.msk [vmem:[%s596 + $0x38] sm:$0xff] %vm631, %v2721
        %2746 = vst.msk [vmem:[%s596 + $0x40] sm:$0xff] %vm631, %v2722
        %2747 = vst.msk [vmem:[%s596 + $0x48] sm:$0xff] %vm631, %v2723
        %2748 = vst.msk [vmem:[%s596 + $0x50] sm:$0xff] %vm631, %v2724
        %2749 = vst.msk [vmem:[%s596 + $0x58] sm:$0xff] %vm631, %v2725
        %2750 = vst.msk [vmem:[%s596 + $0x60] sm:$0xff] %vm631, %v2726
        %2751 = vst.msk [vmem:[%s596 + $0x68] sm:$0xff] %vm631, %v2727
        %2752 = vst.msk [vmem:[%s596 + $0x70] sm:$0xff] %vm631, %v2728
        %2753 = vst.msk [vmem:[%s596 + $0x78] sm:$0xff] %vm631, %v2729
        %2754 = vst.msk [vmem:[%s596 + $0x80] sm:$0xff] %vm631, %v2730
        %2755 = vst.msk [vmem:[%s596 + $0x88] sm:$0xff] %vm631, %v2731
        %2756 = vst.msk [vmem:[%s596 + $0x90] sm:$0xff] %vm631, %v2732
        %2757 = vst.msk [vmem:[%s596 + $0x98] sm:$0xff] %vm631, %v2733
        %2758 = vst.msk [vmem:[%s596 + $0xa0] sm:$0xff] %vm631, %v2734
        %2759 = vst.msk [vmem:[%s596 + $0xa8] sm:$0xff] %vm631, %v2735
        %2760 = vst.msk [vmem:[%s596 + $0xb0] sm:$0xff] %vm631, %v2736
        %2761 = vst.msk [vmem:[%s596 + $0xb8] sm:$0xff] %vm631, %v2737
        %s2762 = sand.u32 %s426, 1
        %s2763 = scalar_lea.sflag [#allocation4], %s2762
        %s2764 = sand.u32 %s426, 1
        %s2765 = smul.addr %s2764, 192
        %s2766 = scalar_lea.vmem [#allocation5], %s2765
        // Predicated region
        $region97: #{tpu_custom_call.1} parent=91 // pred_check
          %p2767 = pneg %p436
        $region98: #{tpu_custom_call.1} parent=91 // pred_check_branch
          %2769 = sbr.rel (%p2767) target = $region100
        $region99: #{tpu_custom_call.1} parent=91 // pred_region
          %s2770 = smul.u32 4, %s35
          %2772 = vsyncadd %s2763, 0
          %s2773 = smul.addr %s2770, 6
          %s2774 = smul.addr %s2773, 8
          %s2775 = scalar_lea.hbm %s18, %s2774
          %s2776 = sshll.u32 %s2766, 4
          %s2777 = int_to_ptr.vmem [resolvable:$true] %s2776
          %s2778 = sshll.u32 %s2775, 4
          %s2779 = int_to_ptr.hbm [resolvable:$true] %s2778
          %2784 = dma.vmem_to_hbm [thread:$0]  %s2777, 3072, %s2779, %s2763, 128, 128, 8
        $region100: #{tpu_custom_call.1} parent=91 // pred_fallthru
          _
      $region92: #{tpu_custom_call.1} parent=5 // pred_fallthru
        _
      %p2785 = scmp.le.s32.totalorder 2, %s30
      // Predicated region
      $region101: #{tpu_custom_call.1} parent=5 // pred_check
        %p2786 = pneg %p2785
      $region102: #{tpu_custom_call.1} parent=5 // pred_check_branch
        %2788 = sbr.rel (%p2786) target = $region104
      $region103: #{tpu_custom_call.1} parent=5 // pred_region
        %s2789 = ssub.s32 %s30, 2
        // Predicated region
        $region105: #{tpu_custom_call.1} parent=103 // pred_check
          %p2790 = pneg %p442
        $region106: #{tpu_custom_call.1} parent=103 // pred_check_branch
          %2792 = sbr.rel (%p2790) target = $region108
        $region107: #{tpu_custom_call.1} parent=103 // pred_region
          %s2793 = sand.u32 %s427, 1
          %s2794 = scalar_lea.sflag [#allocation4], %s2793
          %s2795 = sand.u32 %s427, 1
          %s2796 = smul.addr %s2795, 192
          %s2797 = scalar_lea.vmem [#allocation5], %s2796
          %2799 = dma.done %s2794, 3072
        $region108: #{tpu_custom_call.1} parent=103 // pred_fallthru
          _
      $region104: #{tpu_custom_call.1} parent=5 // pred_fallthru
        _
    $region6: #{tpu_custom_call.1} parent=1 // loop_footer
      %s34 = sadd.s32 1, %s30
    $region7: #{tpu_custom_call.1} parent=1 // loop_footer_branch
      %29 = sbr.rel target = $region3
    $region8: #{tpu_custom_call.1} parent=1 // loop_exit
      _
    %2800 = vsyncpa [#allocation3], 1
    %s2801 = scalar_lea.sflag [#allocation3], 1
    %2802 = vsyncpa %s2801, 1
    %2803 = vsyncpa [#allocation4], 1
    %s2804 = scalar_lea.sflag [#allocation4], 1
    %2805 = vsyncpa %s2804, 1

</llo_original>
